<compile_context>
chip_gen: v7x
topology: tpu7x:2x2x1
jax: 0.10.0
libtpu: 0.0.40
codegen_flags: <defaults>
</compile_context>

<pallas_src>
import functools
from typing import NamedTuple, Tuple

import jax
import jax.numpy as jnp
from jax.experimental import pallas as pl
from jax.experimental.pallas import tpu as pltpu

EMBED = 768


def _round_up(x, m):
    return (x + m - 1) // m * m


class GCAEConfig(NamedTuple):
    kernel_sizes: Tuple[int, ...]
    kernel_num: int
    aspect_kernel_sizes: Tuple[int, ...]
    aspect_kernel_num: int
    num_classes: int


# ------------------------------ fused Pallas kernel --------------------------

def gcae_fused_kernel(xs_ref, xa_ref, ws_ref, bs_ref, wa_ref, ba_ref,
                      wal_ref, bal_ref, wl_ref, bl_ref, o_ref, *,
                      B, Ls, Lpad_s, kernel_sizes, K,
                      Lp_a, Lpad_a, aspect_kernel_sizes, Ka):
    """Whole GCAE forward on VMEM-resident data.

    xs: (Rpad_s, E) bf16   flattened, per-batch time-padded sentence embeddings
    xa: (Rpad_a, E) bf16   flattened, per-batch time-padded (conv-padded) aspect emb.
    ws: (E, Ws_pad) bf16   merged conv+gate weights, uniform tap layout:
                           tap dk block = [conv_s0..conv_s{n-1} | gate_s0..gate_s{n-1}]
                           (zero for taps >= kernel_size of a given size)
    bs: (1, 2*n_s*K) f32   merged biases ([conv all sizes | gate all sizes])
    wa: (E, Wa_pad) bf16   merged aspect conv weights, same uniform tap layout
    ba: (1, n_a*Ka) f32    merged aspect conv biases
    wal/bal: aspect linear (n_a*Ka, K) / (1, K) f32
    wl/bl:  final linear (n_s*K, Cpad) / (1, Cpad) f32 (lane-padded)
    o:  (B, Cpad) f32      lane-padded logits
    """
    f32 = jnp.float32
    NEG = f32(-1e30)
    n_s = len(kernel_sizes)
    n_a = len(aspect_kernel_sizes)
    max_ks = max(kernel_sizes)
    max_ka = max(aspect_kernel_sizes)
    Ws0 = 2 * n_s * K      # per-tap block width of the sentence branch
    Wa0 = n_a * Ka         # per-tap block width of the aspect branch
    nsK = n_s * K

    # ---------------- aspect branch: relu(conv) -> max over time -------------
    Ya = jnp.dot(xa_ref[...], wa_ref[...], preferred_element_type=f32)   # (Rpad_a, Wa_pad)
    Ra = B * Lpad_a
    Sa = Ya[0:Ra, 0:Wa0]                                                  # tap 0
    for dk in range(1, max_ka):                                           # remaining taps
        Sa = Sa + Ya[dk:dk + Ra, dk * Wa0:(dk + 1) * Wa0]
    Sa = jnp.maximum(Sa + ba_ref[...], 0.0).reshape(B, Lpad_a, Wa0)       # (B, Lpad_a, Wa0)

    t_a = jax.lax.broadcasted_iota(jnp.int32, (Lpad_a, Wa0), 0)           # hoisted iota
    lim_a = jnp.concatenate(
        [jnp.full((1, Ka), Lp_a - ka, jnp.int32) for ka in aspect_kernel_sizes], axis=1)
    mask_a = (t_a <= lim_a)[None, :, :]                                    # (1, Lpad_a, Wa0)
    asp_cat = jnp.max(jnp.where(mask_a, Sa, NEG), axis=1)                  # (B, Wa0)
    asp_vec = jnp.dot(asp_cat, wal_ref[...], preferred_element_type=f32) + bal_ref[...]

    # -------- sentence branch: tanh(conv) * relu(gate + aspect) -> max -------
    Ys = jnp.dot(xs_ref[...], ws_ref[...], preferred_element_type=f32)    # (Rpad_s, Ws_pad)
    Rs = B * Lpad_s
    S = Ys[0:Rs, 0:Ws0]                                                    # tap 0
    for dk in range(1, max_ks):
        S = S + Ys[dk:dk + Rs, dk * Ws0:(dk + 1) * Ws0]
    S = S + bs_ref[...]                                                    # (Rs, 2*n_s*K)

    conv = jnp.tanh(S[:, :nsK]).reshape(B, Lpad_s, nsK)                    # lane-dense tanh
    gate_pre = S[:, nsK:].reshape(B, Lpad_s, nsK)
    asp_tile = jnp.concatenate([asp_vec] * n_s, axis=1)[:, None, :]        # (B, 1, nsK)
    prod = conv * jnp.maximum(gate_pre + asp_tile, 0.0)                    # (B, Lpad_s, nsK)

    t_s = jax.lax.broadcasted_iota(jnp.int32, (Lpad_s, nsK), 0)            # hoisted iota
    lim_s = jnp.concatenate(
        [jnp.full((1, K), Ls - ks, jnp.int32) for ks in kernel_sizes], axis=1)
    mask_s = (t_s <= lim_s)[None, :, :]
    sent_cat = jnp.max(jnp.where(mask_s, prod, NEG), axis=1)               # (B, n_s*K)

    # ---------------- final linear (lane-dense padded output) ----------------
    o_ref[...] = jnp.dot(sent_cat, wl_ref[...], preferred_element_type=f32) + bl_ref[...]


# ------------------------- one-time weight packing ----------------------------

def pack_params(params):
    """Repack GCAE weights into the fused-kernel layout.  Call ONCE and reuse."""
    kernel_sizes = tuple(int(w.shape[0]) for (w, _) in params["sent_conv"])
    K = int(params["sent_conv"][0][0].shape[2])
    aspect_kernel_sizes = tuple(int(w.shape[0]) for (w, _) in params["asp_conv"])
    Ka = int(params["asp_conv"][0][0].shape[2])
    C = int(params["lin_w"].shape[1])
    E = int(params["embedding"].shape[1])

    max_ks, max_ka = max(kernel_sizes), max(aspect_kernel_sizes)
    zero_K = jnp.zeros((E, K), jnp.float32)
    zero_Ka = jnp.zeros((E, Ka), jnp.float32)

    # Sentence conv + gate: uniform tap layout (zero weights for missing taps), so a
    # single shift-add loop of max_ks taps is exact for every kernel size.
    tap_blocks = []
    for dk in range(max_ks):
        cols = [wc[dk] if dk < wc.shape[0] else zero_K for (wc, _) in params["sent_conv"]]
        cols += [wg[dk] if dk < wg.shape[0] else zero_K for (wg, _) in params["sent_gate"]]
        tap_blocks.append(jnp.concatenate(cols, axis=1))
    ws = jnp.concatenate(tap_blocks, axis=1)
    ws = jnp.pad(ws, ((0, 0), (0, _round_up(ws.shape[1], 128) - ws.shape[1])))
    ws = ws.astype(jnp.bfloat16)

    bs = jnp.concatenate([b for (_, b) in params["sent_conv"]]
                         + [b for (_, b) in params["sent_gate"]], axis=1)   # (1, 2*n_s*K)

    # Aspect conv: same uniform tap layout.
    tap_blocks = []
    for dk in range(max_ka):
        cols = [w[dk] if dk < w.shape[0] else zero_Ka for (w, _) in params["asp_conv"]]
        tap_blocks.append(jnp.concatenate(cols, axis=1))
    wa = jnp.concatenate(tap_blocks, axis=1)
    wa = jnp.pad(wa, ((0, 0), (0, _round_up(wa.shape[1], 128) - wa.shape[1])))
    wa = wa.astype(jnp.bfloat16)

    ba = jnp.concatenate([b for (_, b) in params["asp_conv"]], axis=1)      # (1, n_a*Ka)

    # Final linear padded to 128 output lanes (lane-dense store).
    Cpad = _round_up(C, 128)
    wl = jnp.pad(params["lin_w"].astype(jnp.float32), ((0, 0), (0, Cpad - C)))
    bl = jnp.pad(params["lin_b"].astype(jnp.float32), ((0, 0), (0, Cpad - C)))

    packed = dict(
        embedding=params["embedding"],
        ws=ws, bs=bs, wa=wa, ba=ba,
        wal=params["asp_lin_w"].astype(jnp.float32),
        bal=params["asp_lin_b"].astype(jnp.float32),
        wl=wl, bl=bl,
    )
    cfg = GCAEConfig(kernel_sizes=kernel_sizes, kernel_num=K,
                     aspect_kernel_sizes=aspect_kernel_sizes, aspect_kernel_num=Ka,
                     num_classes=C)
    return packed, cfg


# --------------------------------- forward -----------------------------------

def _gcae_forward_impl(packed, sentence_ids, aspect_ids, cfg):
    emb = packed["embedding"]
    B, Ls = sentence_ids.shape
    _, La = aspect_ids.shape
    kernel_sizes, K = cfg.kernel_sizes, cfg.kernel_num
    aspect_kernel_sizes, Ka = cfg.aspect_kernel_sizes, cfg.aspect_kernel_num
    C = cfg.num_classes

    # Guard the all-false-mask hazard (a conv kernel wider than its input).
    assert max(kernel_sizes) <= Ls, "sentence kernel size exceeds sentence length"
    assert max(aspect_kernel_sizes) <= La + 2, "aspect kernel size exceeds padded aspect length"

    # -- embedding lookup (XLA gather) + Conv1d(padding=1) time padding (glue) --
    sent = jnp.take(emb, sentence_ids, axis=0)                    # (B, Ls, E)
    asp = jnp.take(emb, aspect_ids, axis=0)                       # (B, La, E)
    asp = jnp.pad(asp, ((0, 0), (1, 1), (0, 0)))                  # padding=1
    Lp_a = La + 2

    # -- activation layout: per-batch time pad to x8, flatten batch into M, bf16 --
    max_ks, max_ka = max(kernel_sizes), max(aspect_kernel_sizes)
    Lpad_s = _round_up(Ls, 8)
    Lpad_a = _round_up(Lp_a, 8)
    Rs, Ra = B * Lpad_s, B * Lpad_a
    Rpad_s = _round_up(Rs + max_ks - 1, 8)    # tail slack for tap shift-adds
    Rpad_a = _round_up(Ra + max_ka - 1, 8)
    # NOTE: tap reads past a batch's valid rows land in zero padding / the next batch;
    # those positions are always masked (t <= L - ks) — keep that invariant.

    def flat_pad(x, Lpad, Rpad):
        xp = jnp.pad(x, ((0, 0), (0, Lpad - x.shape[1]), (0, 0)))
        xp = xp.reshape(x.shape[0] * Lpad, x.shape[2])
        return jnp.pad(xp, ((0, Rpad - xp.shape[0]), (0, 0))).astype(jnp.bfloat16)

    xs = flat_pad(sent, Lpad_s, Rpad_s)                           # (Rpad_s, E) bf16
    xa = flat_pad(asp, Lpad_a, Rpad_a)                            # (Rpad_a, E) bf16

    kernel = functools.partial(
        gcae_fused_kernel, B=B, Ls=Ls, Lpad_s=Lpad_s, kernel_sizes=kernel_sizes, K=K,
        Lp_a=Lp_a, Lpad_a=Lpad_a, aspect_kernel_sizes=aspect_kernel_sizes, Ka=Ka)

    Cpad = packed["wl"].shape[1]
    vmem = pl.BlockSpec(memory_space=pltpu.MemorySpace.VMEM)
    out = pl.pallas_call(
        kernel,
        out_shape=jax.ShapeDtypeStruct((B, Cpad), jnp.float32),
        in_specs=[vmem] * 10,
        out_specs=vmem,
    )(xs, xa, packed["ws"], packed["bs"], packed["wa"], packed["ba"],
      packed["wal"], packed["bal"], packed["wl"], packed["bl"])

    # Dropout is identity at inference time (nn.Dropout in eval mode).
    return out[:, :C]


gcae_forward = jax.jit(_gcae_forward_impl, static_argnames=("cfg",))


# ------------------------------ params / reference ---------------------------

def init_params(key, num_classes, vocab_size, kernel_num, kernel_sizes,
                aspect_kernel_num, aspect_kernel_sizes):
    keys = iter(jax.random.split(key, 64))
    p = {}
    p["embedding"] = 0.02 * jax.random.normal(next(keys), (vocab_size, EMBED), jnp.float32)

    def conv_w(k, out_ch):
        scale = 1.0 / jnp.sqrt(EMBED * k)
        return scale * jax.random.normal(next(keys), (k, EMBED, out_ch), jnp.float32)

    def bias(out_ch):
        return 0.01 * jax.random.normal(next(keys), (1, out_ch), jnp.float32)

    p["sent_conv"] = [(conv_w(k, kernel_num), bias(kernel_num)) for k in kernel_sizes]
    p["sent_gate"] = [(conv_w(k, kernel_num), bias(kernel_num)) for k in kernel_sizes]
    p["asp_conv"] = [(conv_w(k, aspect_kernel_num), bias(aspect_kernel_num))
                     for k in aspect_kernel_sizes]

    asp_in = len(aspect_kernel_sizes) * aspect_kernel_num
    p["asp_lin_w"] = (1.0 / jnp.sqrt(asp_in)) * jax.random.normal(
        next(keys), (asp_in, kernel_num), jnp.float32)
    p["asp_lin_b"] = 0.01 * jax.random.normal(next(keys), (1, kernel_num), jnp.float32)

    lin_in = len(kernel_sizes) * kernel_num
    p["lin_w"] = (1.0 / jnp.sqrt(lin_in)) * jax.random.normal(
        next(keys), (lin_in, num_classes), jnp.float32)
    p["lin_b"] = 0.01 * jax.random.normal(next(keys), (1, num_classes), jnp.float32)
    return p


def _conv1d_ref(x_ble, w_keo, b_o):
    k = w_keo.shape[0]
    T = x_ble.shape[1] - k + 1
    acc = jnp.zeros((x_ble.shape[0], T, w_keo.shape[2]), jnp.float32)
    for dk in range(k):
        acc = acc + jnp.einsum("bte,eo->bto", x_ble[:, dk:dk + T, :], w_keo[dk],
                               precision=jax.lax.Precision.HIGHEST)
    return acc + b_o[0][None, None, :]


def gcae_ref(params, sentence_ids, aspect_ids):
    sent = jnp.take(params["embedding"], sentence_ids, axis=0)
    asp = jnp.take(params["embedding"], aspect_ids, axis=0)
    asp_pad = jnp.pad(asp, ((0, 0), (1, 1), (0, 0)))
    asp_cat = jnp.concatenate(
        [jnp.max(jax.nn.relu(_conv1d_ref(asp_pad, w, b)), axis=1)
         for (w, b) in params["asp_conv"]], axis=1)
    asp_vec = asp_cat @ params["asp_lin_w"] + params["asp_lin_b"]
    sent_cat = jnp.concatenate(
        [jnp.max(jnp.tanh(_conv1d_ref(sent, wc, bc)) *
                 jax.nn.relu(_conv1d_ref(sent, wg, bg) + asp_vec[:, None, :]), axis=1)
         for (wc, bc), (wg, bg) in zip(params["sent_conv"], params["sent_gate"])],
        axis=1)
    return sent_cat @ params["lin_w"] + params["lin_b"]


# ----------------------------------- main ------------------------------------

if __name__ == "__main__":
    num_classes = 3
    vocab_size = 50
    kernel_num = 32
    kernel_sizes = (3, 4)
    aspect_kernel_num = 16
    aspect_kernel_sizes = (3,)
    B, Ls, La = 2, 16, 4

    key = jax.random.PRNGKey(0)
    kp, ks_, ka_ = jax.random.split(key, 3)
    params = init_params(kp, num_classes, vocab_size, kernel_num, kernel_sizes,
                         aspect_kernel_num, aspect_kernel_sizes)
    sentence_ids = jax.random.randint(ks_, (B, Ls), 0, vocab_size, dtype=jnp.int32)
    aspect_ids = jax.random.randint(ka_, (B, La), 0, vocab_size, dtype=jnp.int32)

    # One-time weight packing (hoisted out of the per-call path).
    packed, cfg = pack_params(params)

    logits = jax.block_until_ready(gcae_forward(packed, sentence_ids, aspect_ids, cfg))
    ref = jax.block_until_ready(gcae_ref(params, sentence_ids, aspect_ids))

    assert logits.shape == (B, num_classes)
    assert bool(jnp.allclose(logits, ref, rtol=1e-2, atol=1e-2)), "mismatch vs reference"
    print("KERNEL_OK")
</pallas_src>

<mosaic_0001>
module attributes {stable_mosaic.version = 11 : i64} {
  func.func @gcae_fused_kernel(%arg0: memref<40x768xbf16, #tpu.memory_space<vmem>>, %arg1: memref<24x768xbf16, #tpu.memory_space<vmem>>, %arg2: memref<768x512xbf16, #tpu.memory_space<vmem>>, %arg3: memref<1x128xf32, #tpu.memory_space<vmem>>, %arg4: memref<768x128xbf16, #tpu.memory_space<vmem>>, %arg5: memref<1x16xf32, #tpu.memory_space<vmem>>, %arg6: memref<16x32xf32, #tpu.memory_space<vmem>>, %arg7: memref<1x32xf32, #tpu.memory_space<vmem>>, %arg8: memref<64x128xf32, #tpu.memory_space<vmem>>, %arg9: memref<1x128xf32, #tpu.memory_space<vmem>>, %arg10: memref<2x128xf32, #tpu.memory_space<vmem>>) attributes {dimension_semantics = [], scalar_prefetch = 0 : i64, scratch_operands = 0 : i64, tpu.core_type = #tpu.core_type<tc>} {
    %c0 = arith.constant 0 : index
    %c0_0 = arith.constant 0 : index
    %0 = vector.load %arg1[%c0, %c0_0] : memref<24x768xbf16, #tpu.memory_space<vmem>>, vector<24x768xbf16>
    %c0_1 = arith.constant 0 : index
    %c0_2 = arith.constant 0 : index
    %1 = vector.load %arg4[%c0_1, %c0_2] : memref<768x128xbf16, #tpu.memory_space<vmem>>, vector<768x128xbf16>
    %cst = arith.constant dense<0.000000e+00> : vector<24x128xf32>
    %2 = tpu.matmul %0, %1, %cst {dimension_numbers = #tpu.dot_dimension_numbers<[1], [0], [0], [1], [0, 0, 1, 1], [], []>} : vector<24x768xbf16>, vector<768x128xbf16>, vector<24x128xf32> -> vector<24x128xf32>
    %3 = vector.extract_strided_slice %2 {offsets = [0, 0], sizes = [16, 16], strides = [1, 1]} : vector<24x128xf32> to vector<16x16xf32>
    %4 = vector.extract_strided_slice %2 {offsets = [1, 16], sizes = [16, 16], strides = [1, 1]} : vector<24x128xf32> to vector<16x16xf32>
    %5 = arith.addf %3, %4 : vector<16x16xf32>
    %6 = vector.extract_strided_slice %2 {offsets = [2, 32], sizes = [16, 16], strides = [1, 1]} : vector<24x128xf32> to vector<16x16xf32>
    %7 = arith.addf %5, %6 : vector<16x16xf32>
    %c0_3 = arith.constant 0 : index
    %c0_4 = arith.constant 0 : index
    %8 = vector.load %arg5[%c0_3, %c0_4] : memref<1x16xf32, #tpu.memory_space<vmem>>, vector<1x16xf32>
    %9 = vector.broadcast %8 : vector<1x16xf32> to vector<16x16xf32>
    %10 = arith.addf %7, %9 : vector<16x16xf32>
    %cst_5 = arith.constant 0.000000e+00 : f32
    %11 = vector.broadcast %cst_5 : f32 to vector<16x16xf32>
    %12 = arith.maximumf %10, %11 : vector<16x16xf32>
    %13 = vector.shape_cast %12 : vector<16x16xf32> to vector<2x8x16xf32>
    %14 = tpu.iota {dimensions = array<i32: 0>} : vector<8x16xi32>
    %c3_i32 = arith.constant 3 : i32
    %15 = vector.broadcast %c3_i32 : i32 to vector<1x16xi32>
    %16 = vector.broadcast %15 : vector<1x16xi32> to vector<8x16xi32>
    %17 = arith.cmpi sle, %14, %16 : vector<8x16xi32>
    %18 = vector.shape_cast %17 : vector<8x16xi1> to vector<1x8x16xi1>
    %cst_6 = arith.constant -1.000000e+30 : f32
    %19 = vector.shape_cast %18 : vector<1x8x16xi1> to vector<1x8x16xi1>
    %20 = vector.broadcast %19 : vector<1x8x16xi1> to vector<2x8x16xi1>
    %21 = vector.broadcast %cst_6 : f32 to vector<2x8x16xf32>
    %22 = arith.select %20, %13, %21 : vector<2x8x16xi1>, vector<2x8x16xf32>
    %cst_7 = arith.constant dense<0xFF800000> : vector<2x16xf32>
    %23 = vector.multi_reduction <maximumf>, %22, %cst_7 [1] : vector<2x8x16xf32> to vector<2x16xf32>
    %c0_8 = arith.constant 0 : index
    %c0_9 = arith.constant 0 : index
    %24 = vector.load %arg6[%c0_8, %c0_9] : memref<16x32xf32, #tpu.memory_space<vmem>>, vector<16x32xf32>
    %cst_10 = arith.constant dense<0.000000e+00> : vector<2x32xf32>
    %25 = tpu.matmul %23, %24, %cst_10 {dimension_numbers = #tpu.dot_dimension_numbers<[1], [0], [0], [1], [0, 0, 1, 1], [], []>} : vector<2x16xf32>, vector<16x32xf32>, vector<2x32xf32> -> vector<2x32xf32>
    %c0_11 = arith.constant 0 : index
    %c0_12 = arith.constant 0 : index
    %26 = vector.load %arg7[%c0_11, %c0_12] : memref<1x32xf32, #tpu.memory_space<vmem>>, vector<1x32xf32>
    %27 = vector.broadcast %26 : vector<1x32xf32> to vector<2x32xf32>
    %28 = arith.addf %25, %27 : vector<2x32xf32>
    %c0_13 = arith.constant 0 : index
    %c0_14 = arith.constant 0 : index
    %29 = vector.load %arg0[%c0_13, %c0_14] : memref<40x768xbf16, #tpu.memory_space<vmem>>, vector<40x768xbf16>
    %c0_15 = arith.constant 0 : index
    %c0_16 = arith.constant 0 : index
    %30 = vector.load %arg2[%c0_15, %c0_16] : memref<768x512xbf16, #tpu.memory_space<vmem>>, vector<768x512xbf16>
    %cst_17 = arith.constant dense<0.000000e+00> : vector<40x512xf32>
    %31 = tpu.matmul %29, %30, %cst_17 {dimension_numbers = #tpu.dot_dimension_numbers<[1], [0], [0], [1], [0, 0, 1, 1], [], []>} : vector<40x768xbf16>, vector<768x512xbf16>, vector<40x512xf32> -> vector<40x512xf32>
    %32 = vector.extract_strided_slice %31 {offsets = [0, 0], sizes = [32, 128], strides = [1, 1]} : vector<40x512xf32> to vector<32x128xf32>
    %33 = vector.extract_strided_slice %31 {offsets = [1, 128], sizes = [32, 128], strides = [1, 1]} : vector<40x512xf32> to vector<32x128xf32>
    %34 = arith.addf %32, %33 : vector<32x128xf32>
    %35 = vector.extract_strided_slice %31 {offsets = [2, 256], sizes = [32, 128], strides = [1, 1]} : vector<40x512xf32> to vector<32x128xf32>
    %36 = arith.addf %34, %35 : vector<32x128xf32>
    %37 = vector.extract_strided_slice %31 {offsets = [3, 384], sizes = [32, 128], strides = [1, 1]} : vector<40x512xf32> to vector<32x128xf32>
    %38 = arith.addf %36, %37 : vector<32x128xf32>
    %c0_18 = arith.constant 0 : index
    %c0_19 = arith.constant 0 : index
    %39 = vector.load %arg3[%c0_18, %c0_19] : memref<1x128xf32, #tpu.memory_space<vmem>>, vector<1x128xf32>
    %40 = vector.broadcast %39 : vector<1x128xf32> to vector<32x128xf32>
    %41 = arith.addf %38, %40 : vector<32x128xf32>
    %42 = vector.extract_strided_slice %41 {offsets = [0, 0], sizes = [32, 64], strides = [1, 1]} : vector<32x128xf32> to vector<32x64xf32>
    %43 = math.tanh %42 : vector<32x64xf32>
    %44 = vector.shape_cast %43 : vector<32x64xf32> to vector<2x16x64xf32>
    %45 = vector.extract_strided_slice %41 {offsets = [0, 64], sizes = [32, 64], strides = [1, 1]} : vector<32x128xf32> to vector<32x64xf32>
    %46 = vector.shape_cast %45 : vector<32x64xf32> to vector<2x16x64xf32>
    %47 = tpu.concatenate %28, %28 in 1 : vector<2x32xf32>, vector<2x32xf32> -> vector<2x64xf32>
    %48 = vector.shape_cast %47 : vector<2x64xf32> to vector<2x1x64xf32>
    %49 = vector.broadcast %48 : vector<2x1x64xf32> to vector<2x16x64xf32>
    %50 = arith.addf %46, %49 : vector<2x16x64xf32>
    %cst_20 = arith.constant 0.000000e+00 : f32
    %51 = vector.broadcast %cst_20 : f32 to vector<2x16x64xf32>
    %52 = arith.maximumf %50, %51 : vector<2x16x64xf32>
    %53 = arith.mulf %44, %52 : vector<2x16x64xf32>
    %54 = tpu.iota {dimensions = array<i32: 0>} : vector<16x64xi32>
    %c13_i32 = arith.constant 13 : i32
    %55 = vector.broadcast %c13_i32 : i32 to vector<1x32xi32>
    %c12_i32 = arith.constant 12 : i32
    %56 = vector.broadcast %c12_i32 : i32 to vector<1x32xi32>
    %57 = tpu.concatenate %55, %56 in 1 : vector<1x32xi32>, vector<1x32xi32> -> vector<1x64xi32>
    %58 = vector.broadcast %57 : vector<1x64xi32> to vector<16x64xi32>
    %59 = arith.cmpi sle, %54, %58 : vector<16x64xi32>
    %60 = vector.shape_cast %59 : vector<16x64xi1> to vector<1x16x64xi1>
    %cst_21 = arith.constant -1.000000e+30 : f32
    %61 = vector.shape_cast %60 : vector<1x16x64xi1> to vector<1x16x64xi1>
    %62 = vector.broadcast %61 : vector<1x16x64xi1> to vector<2x16x64xi1>
    %63 = vector.broadcast %cst_21 : f32 to vector<2x16x64xf32>
    %64 = arith.select %62, %53, %63 : vector<2x16x64xi1>, vector<2x16x64xf32>
    %cst_22 = arith.constant dense<0xFF800000> : vector<2x64xf32>
    %65 = vector.multi_reduction <maximumf>, %64, %cst_22 [1] : vector<2x16x64xf32> to vector<2x64xf32>
    %c0_23 = arith.constant 0 : index
    %c0_24 = arith.constant 0 : index
    %66 = vector.load %arg8[%c0_23, %c0_24] : memref<64x128xf32, #tpu.memory_space<vmem>>, vector<64x128xf32>
    %cst_25 = arith.constant dense<0.000000e+00> : vector<2x128xf32>
    %67 = tpu.matmul %65, %66, %cst_25 {dimension_numbers = #tpu.dot_dimension_numbers<[1], [0], [0], [1], [0, 0, 1, 1], [], []>} : vector<2x64xf32>, vector<64x128xf32>, vector<2x128xf32> -> vector<2x128xf32>
    %c0_26 = arith.constant 0 : index
    %c0_27 = arith.constant 0 : index
    %68 = vector.load %arg9[%c0_26, %c0_27] : memref<1x128xf32, #tpu.memory_space<vmem>>, vector<1x128xf32>
    %69 = vector.broadcast %68 : vector<1x128xf32> to vector<2x128xf32>
    %70 = arith.addf %67, %69 : vector<2x128xf32>
    %c0_28 = arith.constant 0 : index
    %c0_29 = arith.constant 0 : index
    %71 = vector.load %arg10[%c0_28, %c0_29] : memref<2x128xf32, #tpu.memory_space<vmem>>, vector<2x128xf32>
    tpu.vector_store %arg10[%c0_28, %c0_29], %70 {strides = array<i32>} : memref<2x128xf32, #tpu.memory_space<vmem>>, vector<2x128xf32>,
    return
  }
}

</mosaic_0001>

<llo_original>
// kernel: _gcae_forward_impl.1
$region0: #{_gcae_forward_impl.1}
  #allocation0 [shape = 'u32[]', space=smem, size = 0x4, offset = 0x4, fixed_abs, tag = 'smem constant byte address 0x4 - core index']
  #allocation1 [shape = 'u32[144,128]{1,0:T(1,128)}', space=vmem, size = 0x12000, scoped, tag = 'internal scratch']
  %s0 = inlined_call_operand.vmem [shape: bf16[40,768], index: 0, kind: input, shape index: {}]
  %s1 = inlined_call_operand.vmem [shape: bf16[24,768], index: 1, kind: input, shape index: {}]
  %s2 = inlined_call_operand.vmem [shape: bf16[768,512], index: 2, kind: input, shape index: {}]
  %s3 = inlined_call_operand.vmem [shape: f32[1,128], index: 3, kind: input, shape index: {}]
  %s4 = inlined_call_operand.hbm [shape: bf16[768,128], index: 4, kind: input, shape index: {}]
  %s5 = inlined_call_operand.vmem [shape: f32[1,16], index: 5, kind: input, shape index: {}]
  %s6 = inlined_call_operand.vmem [shape: f32[16,32], index: 6, kind: input, shape index: {}]
  %s7 = inlined_call_operand.vmem [shape: f32[1,32], index: 7, kind: input, shape index: {}]
  %s8 = inlined_call_operand.vmem [shape: f32[64,128], index: 8, kind: input, shape index: {}]
  %s9 = inlined_call_operand.vmem [shape: f32[1,128], index: 9, kind: input, shape index: {}]
  %s10 = inlined_call_operand.hbm [shape: f32[2,128], index: 10, kind: output, shape index: {}]
  %s11 = sld [smem:[#allocation0]]
  $region54: #{_gcae_forward_impl.1} parent=0
    _
  %s13 = ssub.s32 1, %s11
  %s14 = scalar_select 0, %s13, %s11
  $region1: #{_gcae_forward_impl.1} parent=0
    #allocation2 [shape = 'u8[196608]{0}', space=vmem, size = 0x30000, scoped, tag = 'input window, operand 4, single buffered']
    #allocation3 [shape = 's32[1]{0}', space=sflag, size = 0x4, scoped, tag = 'scoped memory for _gcae_forward_impl.1']
    #allocation4 [shape = 's32[1]{0}', space=sflag, size = 0x4, scoped, tag = 'scoped memory for _gcae_forward_impl.1']
    #allocation5 [shape = 'u8[1024]{0}', space=vmem, size = 0x400, scoped, tag = 'output window, operand 0, single buffered']
    %15 = vsyncpa [#allocation3], 0
    %16 = vsyncpa [#allocation4], 0
    // Predicated region
    $region2: #{_gcae_forward_impl.1} parent=1 // pred_check
      _
    $region3: #{_gcae_forward_impl.1} parent=1 // pred_check_branch
      %18 = sbr.rel (0) target = $region5
    $region4: #{_gcae_forward_impl.1} parent=1 // pred_region
      _
    $region5: #{_gcae_forward_impl.1} parent=1 // pred_fallthru
      _
    // Predicated region
    $region6: #{_gcae_forward_impl.1} parent=1 // pred_check
      _
    $region7: #{_gcae_forward_impl.1} parent=1 // pred_check_branch
      %20 = sbr.rel (0) target = $region9
    $region8: #{_gcae_forward_impl.1} parent=1 // pred_region
      _
    $region9: #{_gcae_forward_impl.1} parent=1 // pred_fallthru
      _
    // Predicated region
    $region10: #{_gcae_forward_impl.1} parent=1 // pred_check
      _
    $region11: #{_gcae_forward_impl.1} parent=1 // pred_check_branch
      %22 = sbr.rel (0) target = $region13
    $region12: #{_gcae_forward_impl.1} parent=1 // pred_region
      _
    $region13: #{_gcae_forward_impl.1} parent=1 // pred_fallthru
      _
    // Predicated region
    $region14: #{_gcae_forward_impl.1} parent=1 // pred_check
      _
    $region15: #{_gcae_forward_impl.1} parent=1 // pred_check_branch
      %24 = sbr.rel (0) target = $region17
    $region16: #{_gcae_forward_impl.1} parent=1 // pred_region
      _
    $region17: #{_gcae_forward_impl.1} parent=1 // pred_fallthru
      _
    // Predicated region
    $region18: #{_gcae_forward_impl.1} parent=1 // pred_check
      _
    $region19: #{_gcae_forward_impl.1} parent=1 // pred_check_branch
      %26 = sbr.rel (0) target = $region21
    $region20: #{_gcae_forward_impl.1} parent=1 // pred_region
      %s28 = ssub.s32 6144, 6144
      %29 = vsyncadd [#allocation3], %s28
      %s30 = sshll.u32 [#allocation2], 4
      %s31 = int_to_ptr.vmem [resolvable:$true] %s30
      %36 = dma.hbm_to_vmem [thread:$0]  %s4, 6144, %s31, [#allocation3], 64, 64, 4
    $region21: #{_gcae_forward_impl.1} parent=1 // pred_fallthru
      _
    // Predicated region
    $region22: #{_gcae_forward_impl.1} parent=1 // pred_check
      _
    $region23: #{_gcae_forward_impl.1} parent=1 // pred_check_branch
      %38 = sbr.rel (0) target = $region25
    $region24: #{_gcae_forward_impl.1} parent=1 // pred_region
      _
    $region25: #{_gcae_forward_impl.1} parent=1 // pred_fallthru
      _
    // Predicated region
    $region26: #{_gcae_forward_impl.1} parent=1 // pred_check
      _
    $region27: #{_gcae_forward_impl.1} parent=1 // pred_check_branch
      %40 = sbr.rel (0) target = $region29
    $region28: #{_gcae_forward_impl.1} parent=1 // pred_region
      _
    $region29: #{_gcae_forward_impl.1} parent=1 // pred_fallthru
      _
    // Predicated region
    $region30: #{_gcae_forward_impl.1} parent=1 // pred_check
      _
    $region31: #{_gcae_forward_impl.1} parent=1 // pred_check_branch
      %42 = sbr.rel (0) target = $region33
    $region32: #{_gcae_forward_impl.1} parent=1 // pred_region
      _
    $region33: #{_gcae_forward_impl.1} parent=1 // pred_fallthru
      _
    // Predicated region
    $region34: #{_gcae_forward_impl.1} parent=1 // pred_check
      _
    $region35: #{_gcae_forward_impl.1} parent=1 // pred_check_branch
      %44 = sbr.rel (0) target = $region37
    $region36: #{_gcae_forward_impl.1} parent=1 // pred_region
      _
    $region37: #{_gcae_forward_impl.1} parent=1 // pred_fallthru
      _
    // Predicated region
    $region38: #{_gcae_forward_impl.1} parent=1 // pred_check
      _
    $region39: #{_gcae_forward_impl.1} parent=1 // pred_check_branch
      %46 = sbr.rel (0) target = $region41
    $region40: #{_gcae_forward_impl.1} parent=1 // pred_region
      _
    $region41: #{_gcae_forward_impl.1} parent=1 // pred_fallthru
      _
    // Predicated region
    $region42: #{_gcae_forward_impl.1} parent=1 // pred_check
      _
    $region43: #{_gcae_forward_impl.1} parent=1 // pred_check_branch
      %48 = sbr.rel (0) target = $region45
    $region44: #{_gcae_forward_impl.1} parent=1 // pred_region
      %49 = dma.done [#allocation3], 6144
    $region45: #{_gcae_forward_impl.1} parent=1 // pred_fallthru
      _
    %v51 = vld [vmem:[%s1] sm:$0xff]
    %v52 = vld [vmem:[%s1 + $0x8] sm:$0xff]
    %v53 = vld [vmem:[%s1 + $0x10] sm:$0xff]
    %v54 = vld [vmem:[%s1 + $0x18] sm:$0xff]
    %v55 = vld [vmem:[%s1 + $0x20] sm:$0xff]
    %v56 = vld [vmem:[%s1 + $0x28] sm:$0xff]
    %v57 = vld [vmem:[%s1 + $0x30] sm:$0xff]
    %v58 = vld [vmem:[%s1 + $0x38] sm:$0xff]
    %v59 = vld [vmem:[%s1 + $0x40] sm:$0xff]
    %v60 = vld [vmem:[#allocation2] sm:$0xf]
    %v61 = vld [vmem:[#allocation2 + $0x4] sm:$0xf]
    %v62 = vld [vmem:[#allocation2 + $0x8] sm:$0xf]
    %v63 = vld [vmem:[#allocation2 + $0xc] sm:$0xf]
    %v64 = vld [vmem:[#allocation2 + $0x10] sm:$0xf]
    %v65 = vld [vmem:[#allocation2 + $0x14] sm:$0xf]
    %v66 = vld [vmem:[#allocation2 + $0x18] sm:$0xf]
    %v67 = vld [vmem:[#allocation2 + $0x1c] sm:$0xf]
    %v68 = vld [vmem:[#allocation2 + $0x20] sm:$0xf]
    %v69 = vld [vmem:[#allocation2 + $0x24] sm:$0xf]
    %v70 = vld [vmem:[#allocation2 + $0x28] sm:$0xf]
    %v71 = vld [vmem:[#allocation2 + $0x2c] sm:$0xf]
    %v72 = vld [vmem:[#allocation2 + $0x30] sm:$0xf]
    %v73 = vld [vmem:[#allocation2 + $0x34] sm:$0xf]
    %v74 = vld [vmem:[#allocation2 + $0x38] sm:$0xf]
    %v75 = vld [vmem:[#allocation2 + $0x3c] sm:$0xf]
    %v76 = vld [vmem:[#allocation2 + $0x40] sm:$0xf]
    %v77 = vld [vmem:[#allocation2 + $0x44] sm:$0xf]
    %v78 = vld [vmem:[#allocation2 + $0x48] sm:$0xf]
    %v79 = vld [vmem:[#allocation2 + $0x4c] sm:$0xf]
    %v80 = vld [vmem:[#allocation2 + $0x50] sm:$0xf]
    %v81 = vld [vmem:[#allocation2 + $0x54] sm:$0xf]
    %v82 = vld [vmem:[#allocation2 + $0x58] sm:$0xf]
    %v83 = vld [vmem:[#allocation2 + $0x5c] sm:$0xf]
    %v84 = vld [vmem:[#allocation2 + $0x60] sm:$0xf]
    %v85 = vld [vmem:[#allocation2 + $0x64] sm:$0xf]
    %v86 = vld [vmem:[#allocation2 + $0x68] sm:$0xf]
    %v87 = vld [vmem:[#allocation2 + $0x6c] sm:$0xf]
    %v88 = vld [vmem:[#allocation2 + $0x70] sm:$0xf]
    %v89 = vld [vmem:[#allocation2 + $0x74] sm:$0xf]
    %v90 = vld [vmem:[#allocation2 + $0x78] sm:$0xf]
    %v91 = vld [vmem:[#allocation2 + $0x7c] sm:$0xf]
    %v92 = vld [vmem:[#allocation2 + $0x80] sm:$0xf]
    %v93 = vld [vmem:[#allocation2 + $0x84] sm:$0xf]
    %v94 = vld [vmem:[#allocation2 + $0x88] sm:$0xf]
    %v95 = vld [vmem:[#allocation2 + $0x8c] sm:$0xf]
    %v96 = vld [vmem:[#allocation2 + $0x90] sm:$0xf]
    %v97 = vld [vmem:[#allocation2 + $0x94] sm:$0xf]
    %v98 = vld [vmem:[#allocation2 + $0x98] sm:$0xf]
    %v99 = vld [vmem:[#allocation2 + $0x9c] sm:$0xf]
    %v100 = vld [vmem:[#allocation2 + $0xa0] sm:$0xf]
    %v101 = vld [vmem:[#allocation2 + $0xa4] sm:$0xf]
    %v102 = vld [vmem:[#allocation2 + $0xa8] sm:$0xf]
    %v103 = vld [vmem:[#allocation2 + $0xac] sm:$0xf]
    %v104 = vld [vmem:[#allocation2 + $0xb0] sm:$0xf]
    %v105 = vld [vmem:[#allocation2 + $0xb4] sm:$0xf]
    %v106 = vld [vmem:[#allocation2 + $0xb8] sm:$0xf]
    %v107 = vld [vmem:[#allocation2 + $0xbc] sm:$0xf]
    %v108 = vld [vmem:[#allocation2 + $0xc0] sm:$0xf]
    %v109 = vld [vmem:[#allocation2 + $0xc4] sm:$0xf]
    %v110 = vld [vmem:[#allocation2 + $0xc8] sm:$0xf]
    %v111 = vld [vmem:[#allocation2 + $0xcc] sm:$0xf]
    %v112 = vld [vmem:[#allocation2 + $0xd0] sm:$0xf]
    %v113 = vld [vmem:[#allocation2 + $0xd4] sm:$0xf]
    %v114 = vld [vmem:[#allocation2 + $0xd8] sm:$0xf]
    %v115 = vld [vmem:[#allocation2 + $0xdc] sm:$0xf]
    %v116 = vld [vmem:[#allocation2 + $0xe0] sm:$0xf]
    %v117 = vld [vmem:[#allocation2 + $0xe4] sm:$0xf]
    %v118 = vld [vmem:[#allocation2 + $0xe8] sm:$0xf]
    %v119 = vld [vmem:[#allocation2 + $0xec] sm:$0xf]
    %v120 = vld [vmem:[#allocation2 + $0xf0] sm:$0xf]
    %v121 = vld [vmem:[#allocation2 + $0xf4] sm:$0xf]
    %v122 = vld [vmem:[#allocation2 + $0xf8] sm:$0xf]
    %v123 = vld [vmem:[#allocation2 + $0xfc] sm:$0xf]
    %v124 = vld [vmem:[#allocation2 + $0x100] sm:$0xf]
    %v125 = vld [vmem:[#allocation2 + $0x104] sm:$0xf]
    %v126 = vld [vmem:[#allocation2 + $0x108] sm:$0xf]
    %v127 = vld [vmem:[#allocation2 + $0x10c] sm:$0xf]
    %v128 = vld [vmem:[#allocation2 + $0x110] sm:$0xf]
    %v129 = vld [vmem:[#allocation2 + $0x114] sm:$0xf]
    %v130 = vld [vmem:[#allocation2 + $0x118] sm:$0xf]
    %v131 = vld [vmem:[#allocation2 + $0x11c] sm:$0xf]
    %v132 = vld [vmem:[#allocation2 + $0x120] sm:$0xf]
    %v133 = vld [vmem:[#allocation2 + $0x124] sm:$0xf]
    %v134 = vld [vmem:[#allocation2 + $0x128] sm:$0xf]
    %v135 = vld [vmem:[#allocation2 + $0x12c] sm:$0xf]
    %v136 = vld [vmem:[#allocation2 + $0x130] sm:$0xf]
    %v137 = vld [vmem:[#allocation2 + $0x134] sm:$0xf]
    %v138 = vld [vmem:[#allocation2 + $0x138] sm:$0xf]
    %v139 = vld [vmem:[#allocation2 + $0x13c] sm:$0xf]
    %v140 = vld [vmem:[#allocation2 + $0x140] sm:$0xf]
    %v141 = vld [vmem:[#allocation2 + $0x144] sm:$0xf]
    %v142 = vld [vmem:[#allocation2 + $0x148] sm:$0xf]
    %v143 = vld [vmem:[#allocation2 + $0x14c] sm:$0xf]
    %v144 = vld [vmem:[#allocation2 + $0x150] sm:$0xf]
    %v145 = vld [vmem:[#allocation2 + $0x154] sm:$0xf]
    %v146 = vld [vmem:[#allocation2 + $0x158] sm:$0xf]
    %v147 = vld [vmem:[#allocation2 + $0x15c] sm:$0xf]
    %v148 = vld [vmem:[#allocation2 + $0x160] sm:$0xf]
    %v149 = vld [vmem:[#allocation2 + $0x164] sm:$0xf]
    %v150 = vld [vmem:[#allocation2 + $0x168] sm:$0xf]
    %v151 = vld [vmem:[#allocation2 + $0x16c] sm:$0xf]
    %v152 = vld [vmem:[#allocation2 + $0x170] sm:$0xf]
    %v153 = vld [vmem:[#allocation2 + $0x174] sm:$0xf]
    %v154 = vld [vmem:[#allocation2 + $0x178] sm:$0xf]
    %v155 = vld [vmem:[#allocation2 + $0x17c] sm:$0xf]
    %v165 = vunpack.c.l.b16 %v51
    %v166 = vunpack.c.h.b16 %v51
    %v167 = vunpack.c.l.b16 %v52
    %v168 = vunpack.c.h.b16 %v52
    %v169 = vunpack.c.l.b16 %v53
    %v170 = vunpack.c.h.b16 %v53
    %v171 = vunpack.c.l.b16 %v54
    %v172 = vunpack.c.h.b16 %v54
    %v173 = vunpack.c.l.b16 %v55
    %v174 = vunpack.c.h.b16 %v55
    %v175 = vunpack.c.l.b16 %v56
    %v176 = vunpack.c.h.b16 %v56
    %v177 = vunpack.c.l.b16 %v57
    %v178 = vunpack.c.h.b16 %v57
    %v179 = vunpack.c.l.b16 %v58
    %v180 = vunpack.c.h.b16 %v58
    %v181 = vunpack.c.l.b16 %v59
    %v182 = vunpack.c.h.b16 %v59
    %v183 = vpack.c.b16 %v171, %v165
    %v184 = vpack.c.b16 %v172, %v166
    %v185 = vpack.c.b16 %v173, %v167
    %v186 = vpack.c.b16 %v174, %v168
    %v187 = vpack.c.b16 %v175, %v169
    %v188 = vpack.c.b16 %v176, %v170
    %v189 = vpack.c.b16 %v177, %v177
    %v190 = vpack.c.b16 %v178, %v178
    %v191 = vpack.c.b16 %v179, %v179
    %v192 = vpack.c.b16 %v180, %v180
    %v193 = vpack.c.b16 %v181, %v181
    %v194 = vpack.c.b16 %v182, %v182
    %v303 = vunpack.c.l.b16 %v60
    %v304 = vunpack.c.l.b16 %v61
    %v305 = vunpack.c.l.b16 %v62
    %v306 = vunpack.c.l.b16 %v63
    %v307 = vunpack.c.l.b16 %v64
    %v308 = vunpack.c.l.b16 %v65
    %v309 = vunpack.c.l.b16 %v66
    %v310 = vunpack.c.l.b16 %v67
    %v311 = vunpack.c.l.b16 %v68
    %v312 = vunpack.c.l.b16 %v69
    %v313 = vunpack.c.l.b16 %v70
    %v314 = vunpack.c.l.b16 %v71
    %v315 = vunpack.c.l.b16 %v72
    %v316 = vunpack.c.l.b16 %v73
    %v317 = vunpack.c.l.b16 %v74
    %v318 = vunpack.c.l.b16 %v75
    %v319 = vunpack.c.l.b16 %v76
    %v320 = vunpack.c.l.b16 %v77
    %v321 = vunpack.c.l.b16 %v78
    %v322 = vunpack.c.l.b16 %v79
    %v323 = vunpack.c.l.b16 %v80
    %v324 = vunpack.c.l.b16 %v81
    %v325 = vunpack.c.l.b16 %v82
    %v326 = vunpack.c.l.b16 %v83
    %v327 = vunpack.c.l.b16 %v84
    %v328 = vunpack.c.l.b16 %v85
    %v329 = vunpack.c.l.b16 %v86
    %v330 = vunpack.c.l.b16 %v87
    %v331 = vunpack.c.l.b16 %v88
    %v332 = vunpack.c.l.b16 %v89
    %v333 = vunpack.c.l.b16 %v90
    %v334 = vunpack.c.l.b16 %v91
    %v335 = vunpack.c.l.b16 %v92
    %v336 = vunpack.c.l.b16 %v93
    %v337 = vunpack.c.l.b16 %v94
    %v338 = vunpack.c.l.b16 %v95
    %v339 = vunpack.c.l.b16 %v96
    %v340 = vunpack.c.l.b16 %v97
    %v341 = vunpack.c.l.b16 %v98
    %v342 = vunpack.c.l.b16 %v99
    %v343 = vunpack.c.l.b16 %v100
    %v344 = vunpack.c.l.b16 %v101
    %v345 = vunpack.c.l.b16 %v102
    %v346 = vunpack.c.l.b16 %v103
    %v347 = vunpack.c.l.b16 %v104
    %v348 = vunpack.c.l.b16 %v105
    %v349 = vunpack.c.l.b16 %v106
    %v350 = vunpack.c.l.b16 %v107
    %v351 = vunpack.c.l.b16 %v108
    %v352 = vunpack.c.l.b16 %v109
    %v353 = vunpack.c.l.b16 %v110
    %v354 = vunpack.c.l.b16 %v111
    %v355 = vunpack.c.l.b16 %v112
    %v356 = vunpack.c.l.b16 %v113
    %v357 = vunpack.c.l.b16 %v114
    %v358 = vunpack.c.l.b16 %v115
    %v359 = vunpack.c.l.b16 %v116
    %v360 = vunpack.c.l.b16 %v117
    %v361 = vunpack.c.l.b16 %v118
    %v362 = vunpack.c.l.b16 %v119
    %v363 = vunpack.c.l.b16 %v120
    %v364 = vunpack.c.l.b16 %v121
    %v365 = vunpack.c.l.b16 %v122
    %v366 = vunpack.c.l.b16 %v123
    %v367 = vunpack.c.l.b16 %v124
    %v368 = vunpack.c.l.b16 %v125
    %v369 = vunpack.c.l.b16 %v126
    %v370 = vunpack.c.l.b16 %v127
    %v371 = vunpack.c.l.b16 %v128
    %v372 = vunpack.c.l.b16 %v129
    %v373 = vunpack.c.l.b16 %v130
    %v374 = vunpack.c.l.b16 %v131
    %v375 = vunpack.c.l.b16 %v132
    %v376 = vunpack.c.l.b16 %v133
    %v377 = vunpack.c.l.b16 %v134
    %v378 = vunpack.c.l.b16 %v135
    %v379 = vunpack.c.l.b16 %v136
    %v380 = vunpack.c.l.b16 %v137
    %v381 = vunpack.c.l.b16 %v138
    %v382 = vunpack.c.l.b16 %v139
    %v383 = vunpack.c.l.b16 %v140
    %v384 = vunpack.c.l.b16 %v141
    %v385 = vunpack.c.l.b16 %v142
    %v386 = vunpack.c.l.b16 %v143
    %v387 = vunpack.c.l.b16 %v144
    %v388 = vunpack.c.l.b16 %v145
    %v389 = vunpack.c.l.b16 %v146
    %v390 = vunpack.c.l.b16 %v147
    %v391 = vunpack.c.l.b16 %v148
    %v392 = vunpack.c.l.b16 %v149
    %v393 = vunpack.c.l.b16 %v150
    %v394 = vunpack.c.l.b16 %v151
    %v395 = vunpack.c.l.b16 %v152
    %v396 = vunpack.c.l.b16 %v153
    %v397 = vunpack.c.l.b16 %v154
    %v398 = vunpack.c.l.b16 %v155
    %v399 = vpack.c.b16 %v304, %v303
    %v400 = vpack.c.b16 %v306, %v305
    %v401 = vpack.c.b16 %v308, %v307
    %v402 = vpack.c.b16 %v310, %v309
    %v403 = vpack.c.b16 %v312, %v311
    %v404 = vpack.c.b16 %v314, %v313
    %v405 = vpack.c.b16 %v316, %v315
    %v406 = vpack.c.b16 %v318, %v317
    %v407 = vpack.c.b16 %v320, %v319
    %v408 = vpack.c.b16 %v322, %v321
    %v409 = vpack.c.b16 %v324, %v323
    %v410 = vpack.c.b16 %v326, %v325
    %v411 = vpack.c.b16 %v328, %v327
    %v412 = vpack.c.b16 %v330, %v329
    %v413 = vpack.c.b16 %v332, %v331
    %v414 = vpack.c.b16 %v334, %v333
    %v415 = vpack.c.b16 %v336, %v335
    %v416 = vpack.c.b16 %v338, %v337
    %v417 = vpack.c.b16 %v340, %v339
    %v418 = vpack.c.b16 %v342, %v341
    %v419 = vpack.c.b16 %v344, %v343
    %v420 = vpack.c.b16 %v346, %v345
    %v421 = vpack.c.b16 %v348, %v347
    %v422 = vpack.c.b16 %v350, %v349
    %v423 = vpack.c.b16 %v352, %v351
    %v424 = vpack.c.b16 %v354, %v353
    %v425 = vpack.c.b16 %v356, %v355
    %v426 = vpack.c.b16 %v358, %v357
    %v427 = vpack.c.b16 %v360, %v359
    %v428 = vpack.c.b16 %v362, %v361
    %v429 = vpack.c.b16 %v364, %v363
    %v430 = vpack.c.b16 %v366, %v365
    %v431 = vpack.c.b16 %v368, %v367
    %v432 = vpack.c.b16 %v370, %v369
    %v433 = vpack.c.b16 %v372, %v371
    %v434 = vpack.c.b16 %v374, %v373
    %v435 = vpack.c.b16 %v376, %v375
    %v436 = vpack.c.b16 %v378, %v377
    %v437 = vpack.c.b16 %v380, %v379
    %v438 = vpack.c.b16 %v382, %v381
    %v439 = vpack.c.b16 %v384, %v383
    %v440 = vpack.c.b16 %v386, %v385
    %v441 = vpack.c.b16 %v388, %v387
    %v442 = vpack.c.b16 %v390, %v389
    %v443 = vpack.c.b16 %v392, %v391
    %v444 = vpack.c.b16 %v394, %v393
    %v445 = vpack.c.b16 %v396, %v395
    %v446 = vpack.c.b16 %v398, %v397
    %495 = vmatprep.subr.bf16.mxu0 0
    %496 = vmatpush1.bf16.msra.mxu0 %v399
    %497 = vmatprep.subr.bf16.mxu0 0
    %498 = vmatpush1.bf16.msra.mxu0 %v400
    %499 = vmatprep.subr.bf16.mxu0 0
    %500 = vmatpush1.bf16.msra.mxu0 %v401
    %501 = vmatprep.subr.bf16.mxu0 0
    %502 = vmatpush1.bf16.msra.mxu0 %v402
    %503 = vmatprep.subr.bf16.mxu0 0
    %504 = vmatpush1.bf16.msra.mxu0 %v403
    %505 = vmatprep.subr.bf16.mxu0 0
    %506 = vmatpush1.bf16.msra.mxu0 %v404
    %507 = vmatprep.subr.bf16.mxu0 0
    %508 = vmatpush1.bf16.msra.mxu0 %v405
    %509 = vmatprep.subr.bf16.mxu0 0
    %510 = vmatpush1.bf16.msra.mxu0 %v406
    %511 = vmatprep.subr.bf16.mxu0 0
    %512 = vmatpush1.bf16.msra.mxu0 %v407
    %513 = vmatprep.subr.bf16.mxu0 0
    %514 = vmatpush1.bf16.msra.mxu0 %v408
    %515 = vmatprep.subr.bf16.mxu0 0
    %516 = vmatpush1.bf16.msra.mxu0 %v409
    %517 = vmatprep.subr.bf16.mxu0 0
    %518 = vmatpush1.bf16.msra.mxu0 %v410
    %519 = vmatprep.subr.bf16.mxu0 0
    %520 = vmatpush1.bf16.msra.mxu0 %v411
    %521 = vmatprep.subr.bf16.mxu0 0
    %522 = vmatpush1.bf16.msra.mxu0 %v412
    %523 = vmatprep.subr.bf16.mxu0 0
    %524 = vmatpush1.bf16.msra.mxu0 %v413
    %525 = vmatprep.subr.bf16.mxu0 0
    %526 = vmatpush1.bf16.msra.mxu0 %v414
    %527 = vmatprep.mubr.bf16.mxu0 %v184
    %528 = vmatmul.mubr.bf16.gmra.mrb[0].mxu0 %v183
    %v529 = vpop.f32.mrb[0].mxu0
    %v530 = vadd.f32 0.0, %v529
    %v531 = vpop.f32.mrb[0].mxu0
    %v532 = vpop.f32.mrb[0].mxu0
    %v533 = vadd.f32 0.0, %v532
    %v534 = vpop.f32.mrb[0].mxu0
    %535 = vmatprep.mubr.bf16.mxu0 %v190
    %536 = vmatmul.mubr.bf16.gmra.mrb[0].mxu0 %v189
    %v537 = vpop.f32.mrb[0].mxu0
    %v538 = vadd.f32 0.0, %v537
    %v539 = vpop.f32.mrb[0].mxu0
    %v540 = vpop.f32.mrb[0].mxu0
    %v541 = vpop.f32.mrb[0].mxu0
    %542 = vdwg.mxu0
    %543 = vmatprep.subr.bf16.mxu0 0
    %544 = vmatpush1.bf16.msra.mxu0 %v415
    %545 = vmatprep.subr.bf16.mxu0 0
    %546 = vmatpush1.bf16.msra.mxu0 %v416
    %547 = vmatprep.subr.bf16.mxu0 0
    %548 = vmatpush1.bf16.msra.mxu0 %v417
    %549 = vmatprep.subr.bf16.mxu0 0
    %550 = vmatpush1.bf16.msra.mxu0 %v418
    %551 = vmatprep.subr.bf16.mxu0 0
    %552 = vmatpush1.bf16.msra.mxu0 %v419
    %553 = vmatprep.subr.bf16.mxu0 0
    %554 = vmatpush1.bf16.msra.mxu0 %v420
    %555 = vmatprep.subr.bf16.mxu0 0
    %556 = vmatpush1.bf16.msra.mxu0 %v421
    %557 = vmatprep.subr.bf16.mxu0 0
    %558 = vmatpush1.bf16.msra.mxu0 %v422
    %559 = vmatprep.subr.bf16.mxu0 0
    %560 = vmatpush1.bf16.msra.mxu0 %v423
    %561 = vmatprep.subr.bf16.mxu0 0
    %562 = vmatpush1.bf16.msra.mxu0 %v424
    %563 = vmatprep.subr.bf16.mxu0 0
    %564 = vmatpush1.bf16.msra.mxu0 %v425
    %565 = vmatprep.subr.bf16.mxu0 0
    %566 = vmatpush1.bf16.msra.mxu0 %v426
    %567 = vmatprep.subr.bf16.mxu0 0
    %568 = vmatpush1.bf16.msra.mxu0 %v427
    %569 = vmatprep.subr.bf16.mxu0 0
    %570 = vmatpush1.bf16.msra.mxu0 %v428
    %571 = vmatprep.subr.bf16.mxu0 0
    %572 = vmatpush1.bf16.msra.mxu0 %v429
    %573 = vmatprep.subr.bf16.mxu0 0
    %574 = vmatpush1.bf16.msra.mxu0 %v430
    %575 = vmatprep.mubr.bf16.mxu0 %v186
    %576 = vmatmul.mubr.bf16.gmra.mrb[0].mxu0 %v185
    %v577 = vpop.f32.mrb[0].mxu0
    %v578 = vadd.f32 %v530, %v577
    %v579 = vpop.f32.mrb[0].mxu0
    %v580 = vpop.f32.mrb[0].mxu0
    %v581 = vadd.f32 %v533, %v580
    %v582 = vpop.f32.mrb[0].mxu0
    %583 = vmatprep.mubr.bf16.mxu0 %v192
    %584 = vmatmul.mubr.bf16.gmra.mrb[0].mxu0 %v191
    %v585 = vpop.f32.mrb[0].mxu0
    %v586 = vadd.f32 %v538, %v585
    %v587 = vpop.f32.mrb[0].mxu0
    %v588 = vpop.f32.mrb[0].mxu0
    %v589 = vpop.f32.mrb[0].mxu0
    %590 = vdwg.mxu0
    %591 = vmatprep.subr.bf16.mxu0 0
    %592 = vmatpush1.bf16.msra.mxu0 %v431
    %593 = vmatprep.subr.bf16.mxu0 0
    %594 = vmatpush1.bf16.msra.mxu0 %v432
    %595 = vmatprep.subr.bf16.mxu0 0
    %596 = vmatpush1.bf16.msra.mxu0 %v433
    %597 = vmatprep.subr.bf16.mxu0 0
    %598 = vmatpush1.bf16.msra.mxu0 %v434
    %599 = vmatprep.subr.bf16.mxu0 0
    %600 = vmatpush1.bf16.msra.mxu0 %v435
    %601 = vmatprep.subr.bf16.mxu0 0
    %602 = vmatpush1.bf16.msra.mxu0 %v436
    %603 = vmatprep.subr.bf16.mxu0 0
    %604 = vmatpush1.bf16.msra.mxu0 %v437
    %605 = vmatprep.subr.bf16.mxu0 0
    %606 = vmatpush1.bf16.msra.mxu0 %v438
    %607 = vmatprep.subr.bf16.mxu0 0
    %608 = vmatpush1.bf16.msra.mxu0 %v439
    %609 = vmatprep.subr.bf16.mxu0 0
    %610 = vmatpush1.bf16.msra.mxu0 %v440
    %611 = vmatprep.subr.bf16.mxu0 0
    %612 = vmatpush1.bf16.msra.mxu0 %v441
    %613 = vmatprep.subr.bf16.mxu0 0
    %614 = vmatpush1.bf16.msra.mxu0 %v442
    %615 = vmatprep.subr.bf16.mxu0 0
    %616 = vmatpush1.bf16.msra.mxu0 %v443
    %617 = vmatprep.subr.bf16.mxu0 0
    %618 = vmatpush1.bf16.msra.mxu0 %v444
    %619 = vmatprep.subr.bf16.mxu0 0
    %620 = vmatpush1.bf16.msra.mxu0 %v445
    %621 = vmatprep.subr.bf16.mxu0 0
    %622 = vmatpush1.bf16.msra.mxu0 %v446
    %623 = vmatprep.mubr.bf16.mxu0 %v188
    %624 = vmatmul.mubr.bf16.gmra.mrb[0].mxu0 %v187
    %v625 = vpop.f32.mrb[0].mxu0
    %v626 = vadd.f32 %v578, %v625
    %v627 = vpop.f32.mrb[0].mxu0
    %v628 = vpop.f32.mrb[0].mxu0
    %v629 = vadd.f32 %v581, %v628
    %v630 = vpop.f32.mrb[0].mxu0
    %631 = vmatprep.mubr.bf16.mxu0 %v194
    %632 = vmatmul.mubr.bf16.gmra.mrb[0].mxu0 %v193
    %v633 = vpop.f32.mrb[0].mxu0
    %v634 = vadd.f32 %v586, %v633
    %v635 = vpop.f32.mrb[0].mxu0
    %v636 = vpop.f32.mrb[0].mxu0
    %v637 = vpop.f32.mrb[0].mxu0
    %638 = vdwg.mxu0
    %vm642 = vcmask 1046528
    %v643 = vrot.slane %v626, 1
    %v644 = vrot.slane %v629, 1
    %v645 = vsel %vm642, %v643, %v644
    %v646 = vrot.slane %v634, 1
    %v647 = vsel %vm642, %v644, %v646
    %648 = vrot.lane.b32.xlu0 %v645, 112
    %v649 = vpop.permute.xlu0 %648
    %650 = vrot.lane.b32.xlu0 %v647, 112
    %v651 = vpop.permute.xlu0 %650
    %v654 = vadd.f32 %v626, %v649
    %v655 = vadd.f32 %v629, %v651
    %vm656 = vcmask 1045504
    %v657 = vrot.slane %v626, 2
    %v658 = vrot.slane %v629, 2
    %v659 = vsel %vm656, %v657, %v658
    %v660 = vrot.slane %v634, 2
    %v661 = vsel %vm656, %v658, %v660
    %662 = vrot.lane.b32.xlu0 %v659, 96
    %v663 = vpop.permute.xlu0 %662
    %664 = vrot.lane.b32.xlu0 %v661, 96
    %v665 = vpop.permute.xlu0 %664
    %v668 = vadd.f32 %v654, %v663
    %v669 = vadd.f32 %v655, %v665
    %v670 = vld [vmem:[%s5] sm:$0x1]
    %v672 = vlaneseq
    %v673 = vshrl.u32 %v672, 7
    %v674 = vsub.s32 0, %v673
    %v675 = vrot.slane %v670, %v674
    %v677 = vadd.f32 %v668, %v675
    %v678 = vadd.f32 %v669, %v675
    %v679 = vmax.f32 %v677, 0.0
    %v680 = vmax.f32 %v678, 0.0
    %v681 = vlaneseq
    %v682 = vshrl.u32 %v681, 7
    %vm683 = vcmp.le.s32.totalorder %v682, 3
    %v684 = vsel %vm683, 1, 0
    %vm685 = vcmp.eq.s32.totalorder %v684, 1
    %v686 = vsel %vm685, %v679, -1e+30
    %v687 = vsel %vm685, %v680, -1e+30
    %vm688 = vcmask 130048
    %v689 = vsel %vm688, %v686, -inf
    %v690 = vrot.slane %v689, 4
    %v691 = vmax.f32 %v689, %v690
    %v692 = vrot.slane %v691, 2
    %v693 = vmax.f32 %v691, %v692
    %v694 = vrot.slane %v693, 1
    %v695 = vmax.f32 %v693, %v694
    %v696 = vsel %vm688, %v687, -inf
    %v697 = vrot.slane %v696, 4
    %v698 = vmax.f32 %v696, %v697
    %v699 = vrot.slane %v698, 2
    %v700 = vmax.f32 %v698, %v699
    %v701 = vrot.slane %v700, 1
    %v702 = vmax.f32 %v700, %v701
    %v703 = vld [vmem:[%s6] sm:$0xff]
    %v704 = vld [vmem:[%s6 + $0x8] sm:$0xff]
    %v705 = vld [vmem:[%s7] sm:$0x1]
    %v707 = vlaneseq
    %v708 = vshrl.u32 %v707, 7
    %v709 = vsub.s32 0, %v708
    %v710 = vrot.slane %v705, %v709
    %vm714 = vcmask 1041409
    %v715 = vsel %vm714, %v702, %v695
    %v716 = vsel %vm688, %v715, 0
    %718 = vmatprep.subr.mxu0 0.0
    %719 = vmatpush1.msra.mxu0 %v703
    %720 = vmatprep.subr.mxu0 0.0
    %721 = vmatpush1.msra.mxu0 %v704
    %722 = vmatprep.subr.mxu0 0.0
    %723 = vmatpush1.msra.mxu0 0.0
    %724 = vmatprep.subr.mxu0 0.0
    %725 = vmatpush1.msra.mxu0 0.0
    %726 = vmatprep.subr.mxu0 0.0
    %727 = vmatpush1.msra.mxu0 0.0
    %728 = vmatprep.subr.mxu0 0.0
    %729 = vmatpush1.msra.mxu0 0.0
    %730 = vmatprep.subr.mxu0 0.0
    %731 = vmatpush1.msra.mxu0 0.0
    %732 = vmatprep.subr.mxu0 0.0
    %733 = vmatpush1.msra.mxu0 0.0
    %734 = vmatprep.subr.mxu0 0.0
    %735 = vmatpush1.msra.mxu0 0.0
    %736 = vmatprep.subr.mxu0 0.0
    %737 = vmatpush1.msra.mxu0 0.0
    %738 = vmatprep.subr.mxu0 0.0
    %739 = vmatpush1.msra.mxu0 0.0
    %740 = vmatprep.subr.mxu0 0.0
    %741 = vmatpush1.msra.mxu0 0.0
    %742 = vmatprep.subr.mxu0 0.0
    %743 = vmatpush1.msra.mxu0 0.0
    %744 = vmatprep.subr.mxu0 0.0
    %745 = vmatpush1.msra.mxu0 0.0
    %746 = vmatprep.subr.mxu0 0.0
    %747 = vmatpush1.msra.mxu0 0.0
    %748 = vmatprep.subr.mxu0 0.0
    %749 = vmatpush1.msra.mxu0 0.0
    %750 = vmatprep.subr.mxu0 0.0
    %751 = vmatpush1.msra.mxu0 0.0
    %752 = vmatprep.subr.mxu0 0.0
    %753 = vmatpush1.msra.mxu0 0.0
    %754 = vmatprep.subr.mxu0 0.0
    %755 = vmatpush1.msra.mxu0 0.0
    %756 = vmatprep.subr.mxu0 0.0
    %757 = vmatpush1.msra.mxu0 0.0
    %758 = vmatprep.subr.mxu0 0.0
    %759 = vmatpush1.msra.mxu0 0.0
    %760 = vmatprep.subr.mxu0 0.0
    %761 = vmatpush1.msra.mxu0 0.0
    %762 = vmatprep.subr.mxu0 0.0
    %763 = vmatpush1.msra.mxu0 0.0
    %764 = vmatprep.subr.mxu0 0.0
    %765 = vmatpush1.msra.mxu0 0.0
    %766 = vmatprep.subr.mxu0 0.0
    %767 = vmatpush1.msra.mxu0 0.0
    %768 = vmatprep.subr.mxu0 0.0
    %769 = vmatpush1.msra.mxu0 0.0
    %770 = vmatprep.subr.mxu0 0.0
    %771 = vmatpush1.msra.mxu0 0.0
    %772 = vmatprep.subr.mxu0 0.0
    %773 = vmatpush1.msra.mxu0 0.0
    %774 = vmatprep.subr.mxu0 0.0
    %775 = vmatpush1.msra.mxu0 0.0
    %776 = vmatprep.subr.mxu0 0.0
    %777 = vmatpush1.msra.mxu0 0.0
    %778 = vmatprep.subr.mxu0 0.0
    %779 = vmatpush1.msra.mxu0 0.0
    %780 = vmatprep.subr.mxu0 0.0
    %781 = vmatpush1.msra.mxu0 0.0
    %782 = vmatprep.mubr.f32.mxu0 0.0
    %783 = vmatmul.mubr.f32.gmra.mrb[0].mxu0 %v716
    %v784 = vpop.f32.mrb[0].mxu0
    %v785 = vadd.f32 %v710, %v784
    %v786 = vpop.f32.mrb[0].mxu0
    %787 = vdwg.mxu0
    %v788 = vld [vmem:[%s0] sm:$0xff]
    %v789 = vld [vmem:[%s0 + $0x8] sm:$0xff]
    %v790 = vld [vmem:[%s0 + $0x10] sm:$0xff]
    %v791 = vld [vmem:[%s0 + $0x18] sm:$0xff]
    %v792 = vld [vmem:[%s0 + $0x20] sm:$0xff]
    %v793 = vld [vmem:[%s0 + $0x28] sm:$0xff]
    %v794 = vld [vmem:[%s0 + $0x30] sm:$0xff]
    %v795 = vld [vmem:[%s0 + $0x38] sm:$0xff]
    %v796 = vld [vmem:[%s0 + $0x40] sm:$0xff]
    %v797 = vld [vmem:[%s0 + $0x48] sm:$0xff]
    %v798 = vld [vmem:[%s0 + $0x50] sm:$0xff]
    %v799 = vld [vmem:[%s0 + $0x58] sm:$0xff]
    %v800 = vld [vmem:[%s0 + $0x60] sm:$0xff]
    %v801 = vld [vmem:[%s0 + $0x68] sm:$0xff]
    %v802 = vld [vmem:[%s0 + $0x70] sm:$0xff]
    %v803 = vld [vmem:[%s2] sm:$0xff]
    %v804 = vld [vmem:[%s2 + $0x8] sm:$0xff]
    %v805 = vld [vmem:[%s2 + $0x10] sm:$0xff]
    %v806 = vld [vmem:[%s2 + $0x18] sm:$0xff]
    %v807 = vld [vmem:[%s2 + $0x20] sm:$0xff]
    %v808 = vld [vmem:[%s2 + $0x28] sm:$0xff]
    %v809 = vld [vmem:[%s2 + $0x30] sm:$0xff]
    %v810 = vld [vmem:[%s2 + $0x38] sm:$0xff]
    %v811 = vld [vmem:[%s2 + $0x40] sm:$0xff]
    %v812 = vld [vmem:[%s2 + $0x48] sm:$0xff]
    %v813 = vld [vmem:[%s2 + $0x50] sm:$0xff]
    %v814 = vld [vmem:[%s2 + $0x58] sm:$0xff]
    %v815 = vld [vmem:[%s2 + $0x60] sm:$0xff]
    %v816 = vld [vmem:[%s2 + $0x68] sm:$0xff]
    %v817 = vld [vmem:[%s2 + $0x70] sm:$0xff]
    %v818 = vld [vmem:[%s2 + $0x78] sm:$0xff]
    %v819 = vld [vmem:[%s2 + $0x80] sm:$0xff]
    %v820 = vld [vmem:[%s2 + $0x88] sm:$0xff]
    %v821 = vld [vmem:[%s2 + $0x90] sm:$0xff]
    %v822 = vld [vmem:[%s2 + $0x98] sm:$0xff]
    %v823 = vld [vmem:[%s2 + $0xa0] sm:$0xff]
    %v824 = vld [vmem:[%s2 + $0xa8] sm:$0xff]
    %v825 = vld [vmem:[%s2 + $0xb0] sm:$0xff]
    %v826 = vld [vmem:[%s2 + $0xb8] sm:$0xff]
    %v827 = vld [vmem:[%s2 + $0xc0] sm:$0xff]
    %v828 = vld [vmem:[%s2 + $0xc8] sm:$0xff]
    %v829 = vld [vmem:[%s2 + $0xd0] sm:$0xff]
    %v830 = vld [vmem:[%s2 + $0xd8] sm:$0xff]
    %v831 = vld [vmem:[%s2 + $0xe0] sm:$0xff]
    %v832 = vld [vmem:[%s2 + $0xe8] sm:$0xff]
    %v833 = vld [vmem:[%s2 + $0xf0] sm:$0xff]
    %v834 = vld [vmem:[%s2 + $0xf8] sm:$0xff]
    %v835 = vld [vmem:[%s2 + $0x100] sm:$0xff]
    %v836 = vld [vmem:[%s2 + $0x108] sm:$0xff]
    %v837 = vld [vmem:[%s2 + $0x110] sm:$0xff]
    %v838 = vld [vmem:[%s2 + $0x118] sm:$0xff]
    %v839 = vld [vmem:[%s2 + $0x120] sm:$0xff]
    %v840 = vld [vmem:[%s2 + $0x128] sm:$0xff]
    %v841 = vld [vmem:[%s2 + $0x130] sm:$0xff]
    %v842 = vld [vmem:[%s2 + $0x138] sm:$0xff]
    %v843 = vld [vmem:[%s2 + $0x140] sm:$0xff]
    %v844 = vld [vmem:[%s2 + $0x148] sm:$0xff]
    %v845 = vld [vmem:[%s2 + $0x150] sm:$0xff]
    %v846 = vld [vmem:[%s2 + $0x158] sm:$0xff]
    %v847 = vld [vmem:[%s2 + $0x160] sm:$0xff]
    %v848 = vld [vmem:[%s2 + $0x168] sm:$0xff]
    %v849 = vld [vmem:[%s2 + $0x170] sm:$0xff]
    %v850 = vld [vmem:[%s2 + $0x178] sm:$0xff]
    %v851 = vld [vmem:[%s2 + $0x180] sm:$0xff]
    %v852 = vld [vmem:[%s2 + $0x188] sm:$0xff]
    %v853 = vld [vmem:[%s2 + $0x190] sm:$0xff]
    %v854 = vld [vmem:[%s2 + $0x198] sm:$0xff]
    %v855 = vld [vmem:[%s2 + $0x1a0] sm:$0xff]
    %v856 = vld [vmem:[%s2 + $0x1a8] sm:$0xff]
    %v857 = vld [vmem:[%s2 + $0x1b0] sm:$0xff]
    %v858 = vld [vmem:[%s2 + $0x1b8] sm:$0xff]
    %v859 = vld [vmem:[%s2 + $0x1c0] sm:$0xff]
    %v860 = vld [vmem:[%s2 + $0x1c8] sm:$0xff]
    %v861 = vld [vmem:[%s2 + $0x1d0] sm:$0xff]
    %v862 = vld [vmem:[%s2 + $0x1d8] sm:$0xff]
    %v863 = vld [vmem:[%s2 + $0x1e0] sm:$0xff]
    %v864 = vld [vmem:[%s2 + $0x1e8] sm:$0xff]
    %v865 = vld [vmem:[%s2 + $0x1f0] sm:$0xff]
    %v866 = vld [vmem:[%s2 + $0x1f8] sm:$0xff]
    %v867 = vld [vmem:[%s2 + $0x200] sm:$0xff]
    %v868 = vld [vmem:[%s2 + $0x208] sm:$0xff]
    %v869 = vld [vmem:[%s2 + $0x210] sm:$0xff]
    %v870 = vld [vmem:[%s2 + $0x218] sm:$0xff]
    %v871 = vld [vmem:[%s2 + $0x220] sm:$0xff]
    %v872 = vld [vmem:[%s2 + $0x228] sm:$0xff]
    %v873 = vld [vmem:[%s2 + $0x230] sm:$0xff]
    %v874 = vld [vmem:[%s2 + $0x238] sm:$0xff]
    %v875 = vld [vmem:[%s2 + $0x240] sm:$0xff]
    %v876 = vld [vmem:[%s2 + $0x248] sm:$0xff]
    %v877 = vld [vmem:[%s2 + $0x250] sm:$0xff]
    %v878 = vld [vmem:[%s2 + $0x258] sm:$0xff]
    %v879 = vld [vmem:[%s2 + $0x260] sm:$0xff]
    %v880 = vld [vmem:[%s2 + $0x268] sm:$0xff]
    %v881 = vld [vmem:[%s2 + $0x270] sm:$0xff]
    %v882 = vld [vmem:[%s2 + $0x278] sm:$0xff]
    %v883 = vld [vmem:[%s2 + $0x280] sm:$0xff]
    %v884 = vld [vmem:[%s2 + $0x288] sm:$0xff]
    %v885 = vld [vmem:[%s2 + $0x290] sm:$0xff]
    %v886 = vld [vmem:[%s2 + $0x298] sm:$0xff]
    %v887 = vld [vmem:[%s2 + $0x2a0] sm:$0xff]
    %v888 = vld [vmem:[%s2 + $0x2a8] sm:$0xff]
    %v889 = vld [vmem:[%s2 + $0x2b0] sm:$0xff]
    %v890 = vld [vmem:[%s2 + $0x2b8] sm:$0xff]
    %v891 = vld [vmem:[%s2 + $0x2c0] sm:$0xff]
    %v892 = vld [vmem:[%s2 + $0x2c8] sm:$0xff]
    %v893 = vld [vmem:[%s2 + $0x2d0] sm:$0xff]
    %v894 = vld [vmem:[%s2 + $0x2d8] sm:$0xff]
    %v895 = vld [vmem:[%s2 + $0x2e0] sm:$0xff]
    %v896 = vld [vmem:[%s2 + $0x2e8] sm:$0xff]
    %v897 = vld [vmem:[%s2 + $0x2f0] sm:$0xff]
    %v898 = vld [vmem:[%s2 + $0x2f8] sm:$0xff]
    %v899 = vld [vmem:[%s2 + $0x300] sm:$0xff]
    %v900 = vld [vmem:[%s2 + $0x308] sm:$0xff]
    %v901 = vld [vmem:[%s2 + $0x310] sm:$0xff]
    %v902 = vld [vmem:[%s2 + $0x318] sm:$0xff]
    %v903 = vld [vmem:[%s2 + $0x320] sm:$0xff]
    %v904 = vld [vmem:[%s2 + $0x328] sm:$0xff]
    %v905 = vld [vmem:[%s2 + $0x330] sm:$0xff]
    %v906 = vld [vmem:[%s2 + $0x338] sm:$0xff]
    %v907 = vld [vmem:[%s2 + $0x340] sm:$0xff]
    %v908 = vld [vmem:[%s2 + $0x348] sm:$0xff]
    %v909 = vld [vmem:[%s2 + $0x350] sm:$0xff]
    %v910 = vld [vmem:[%s2 + $0x358] sm:$0xff]
    %v911 = vld [vmem:[%s2 + $0x360] sm:$0xff]
    %v912 = vld [vmem:[%s2 + $0x368] sm:$0xff]
    %v913 = vld [vmem:[%s2 + $0x370] sm:$0xff]
    %v914 = vld [vmem:[%s2 + $0x378] sm:$0xff]
    %v915 = vld [vmem:[%s2 + $0x380] sm:$0xff]
    %v916 = vld [vmem:[%s2 + $0x388] sm:$0xff]
    %v917 = vld [vmem:[%s2 + $0x390] sm:$0xff]
    %v918 = vld [vmem:[%s2 + $0x398] sm:$0xff]
    %v919 = vld [vmem:[%s2 + $0x3a0] sm:$0xff]
    %v920 = vld [vmem:[%s2 + $0x3a8] sm:$0xff]
    %v921 = vld [vmem:[%s2 + $0x3b0] sm:$0xff]
    %v922 = vld [vmem:[%s2 + $0x3b8] sm:$0xff]
    %v923 = vld [vmem:[%s2 + $0x3c0] sm:$0xff]
    %v924 = vld [vmem:[%s2 + $0x3c8] sm:$0xff]
    %v925 = vld [vmem:[%s2 + $0x3d0] sm:$0xff]
    %v926 = vld [vmem:[%s2 + $0x3d8] sm:$0xff]
    %v927 = vld [vmem:[%s2 + $0x3e0] sm:$0xff]
    %v928 = vld [vmem:[%s2 + $0x3e8] sm:$0xff]
    %v929 = vld [vmem:[%s2 + $0x3f0] sm:$0xff]
    %v930 = vld [vmem:[%s2 + $0x3f8] sm:$0xff]
    %v931 = vld [vmem:[%s2 + $0x400] sm:$0xff]
    %v932 = vld [vmem:[%s2 + $0x408] sm:$0xff]
    %v933 = vld [vmem:[%s2 + $0x410] sm:$0xff]
    %v934 = vld [vmem:[%s2 + $0x418] sm:$0xff]
    %v935 = vld [vmem:[%s2 + $0x420] sm:$0xff]
    %v936 = vld [vmem:[%s2 + $0x428] sm:$0xff]
    %v937 = vld [vmem:[%s2 + $0x430] sm:$0xff]
    %v938 = vld [vmem:[%s2 + $0x438] sm:$0xff]
    %v939 = vld [vmem:[%s2 + $0x440] sm:$0xff]
    %v940 = vld [vmem:[%s2 + $0x448] sm:$0xff]
    %v941 = vld [vmem:[%s2 + $0x450] sm:$0xff]
    %v942 = vld [vmem:[%s2 + $0x458] sm:$0xff]
    %v943 = vld [vmem:[%s2 + $0x460] sm:$0xff]
    %v944 = vld [vmem:[%s2 + $0x468] sm:$0xff]
    %v945 = vld [vmem:[%s2 + $0x470] sm:$0xff]
    %v946 = vld [vmem:[%s2 + $0x478] sm:$0xff]
    %v947 = vld [vmem:[%s2 + $0x480] sm:$0xff]
    %v948 = vld [vmem:[%s2 + $0x488] sm:$0xff]
    %v949 = vld [vmem:[%s2 + $0x490] sm:$0xff]
    %v950 = vld [vmem:[%s2 + $0x498] sm:$0xff]
    %v951 = vld [vmem:[%s2 + $0x4a0] sm:$0xff]
    %v952 = vld [vmem:[%s2 + $0x4a8] sm:$0xff]
    %v953 = vld [vmem:[%s2 + $0x4b0] sm:$0xff]
    %v954 = vld [vmem:[%s2 + $0x4b8] sm:$0xff]
    %v955 = vld [vmem:[%s2 + $0x4c0] sm:$0xff]
    %v956 = vld [vmem:[%s2 + $0x4c8] sm:$0xff]
    %v957 = vld [vmem:[%s2 + $0x4d0] sm:$0xff]
    %v958 = vld [vmem:[%s2 + $0x4d8] sm:$0xff]
    %v959 = vld [vmem:[%s2 + $0x4e0] sm:$0xff]
    %v960 = vld [vmem:[%s2 + $0x4e8] sm:$0xff]
    %v961 = vld [vmem:[%s2 + $0x4f0] sm:$0xff]
    %v962 = vld [vmem:[%s2 + $0x4f8] sm:$0xff]
    %v963 = vld [vmem:[%s2 + $0x500] sm:$0xff]
    %v964 = vld [vmem:[%s2 + $0x508] sm:$0xff]
    %v965 = vld [vmem:[%s2 + $0x510] sm:$0xff]
    %v966 = vld [vmem:[%s2 + $0x518] sm:$0xff]
    %v967 = vld [vmem:[%s2 + $0x520] sm:$0xff]
    %v968 = vld [vmem:[%s2 + $0x528] sm:$0xff]
    %v969 = vld [vmem:[%s2 + $0x530] sm:$0xff]
    %v970 = vld [vmem:[%s2 + $0x538] sm:$0xff]
    %v971 = vld [vmem:[%s2 + $0x540] sm:$0xff]
    %v972 = vld [vmem:[%s2 + $0x548] sm:$0xff]
    %v973 = vld [vmem:[%s2 + $0x550] sm:$0xff]
    %v974 = vld [vmem:[%s2 + $0x558] sm:$0xff]
    %v975 = vld [vmem:[%s2 + $0x560] sm:$0xff]
    %v976 = vld [vmem:[%s2 + $0x568] sm:$0xff]
    %v977 = vld [vmem:[%s2 + $0x570] sm:$0xff]
    %v978 = vld [vmem:[%s2 + $0x578] sm:$0xff]
    %v979 = vld [vmem:[%s2 + $0x580] sm:$0xff]
    %v980 = vld [vmem:[%s2 + $0x588] sm:$0xff]
    %v981 = vld [vmem:[%s2 + $0x590] sm:$0xff]
    %v982 = vld [vmem:[%s2 + $0x598] sm:$0xff]
    %v983 = vld [vmem:[%s2 + $0x5a0] sm:$0xff]
    %v984 = vld [vmem:[%s2 + $0x5a8] sm:$0xff]
    %v985 = vld [vmem:[%s2 + $0x5b0] sm:$0xff]
    %v986 = vld [vmem:[%s2 + $0x5b8] sm:$0xff]
    %v987 = vld [vmem:[%s2 + $0x5c0] sm:$0xff]
    %v988 = vld [vmem:[%s2 + $0x5c8] sm:$0xff]
    %v989 = vld [vmem:[%s2 + $0x5d0] sm:$0xff]
    %v990 = vld [vmem:[%s2 + $0x5d8] sm:$0xff]
    %v991 = vld [vmem:[%s2 + $0x5e0] sm:$0xff]
    %v992 = vld [vmem:[%s2 + $0x5e8] sm:$0xff]
    %v993 = vld [vmem:[%s2 + $0x5f0] sm:$0xff]
    %v994 = vld [vmem:[%s2 + $0x5f8] sm:$0xff]
    %v1010 = vunpack.c.l.b16 %v788
    %v1011 = vunpack.c.h.b16 %v788
    %v1012 = vunpack.c.l.b16 %v789
    %v1013 = vunpack.c.h.b16 %v789
    %v1014 = vunpack.c.l.b16 %v790
    %v1015 = vunpack.c.h.b16 %v790
    %v1016 = vunpack.c.l.b16 %v791
    %v1017 = vunpack.c.h.b16 %v791
    %v1018 = vunpack.c.l.b16 %v792
    %v1019 = vunpack.c.h.b16 %v792
    %v1020 = vunpack.c.l.b16 %v793
    %v1021 = vunpack.c.h.b16 %v793
    %v1022 = vunpack.c.l.b16 %v794
    %v1023 = vunpack.c.h.b16 %v794
    %v1024 = vunpack.c.l.b16 %v795
    %v1025 = vunpack.c.h.b16 %v795
    %v1026 = vunpack.c.l.b16 %v796
    %v1027 = vunpack.c.h.b16 %v796
    %v1028 = vunpack.c.l.b16 %v797
    %v1029 = vunpack.c.h.b16 %v797
    %v1030 = vunpack.c.l.b16 %v798
    %v1031 = vunpack.c.h.b16 %v798
    %v1032 = vunpack.c.l.b16 %v799
    %v1033 = vunpack.c.h.b16 %v799
    %v1034 = vunpack.c.l.b16 %v800
    %v1035 = vunpack.c.h.b16 %v800
    %v1036 = vunpack.c.l.b16 %v801
    %v1037 = vunpack.c.h.b16 %v801
    %v1038 = vunpack.c.l.b16 %v802
    %v1039 = vunpack.c.h.b16 %v802
    %v1040 = vpack.c.b16 %v1016, %v1010
    %v1041 = vpack.c.b16 %v1017, %v1011
    %v1042 = vpack.c.b16 %v1018, %v1012
    %v1043 = vpack.c.b16 %v1019, %v1013
    %v1044 = vpack.c.b16 %v1020, %v1014
    %v1045 = vpack.c.b16 %v1021, %v1015
    %v1046 = vpack.c.b16 %v1028, %v1022
    %v1047 = vpack.c.b16 %v1029, %v1023
    %v1048 = vpack.c.b16 %v1030, %v1024
    %v1049 = vpack.c.b16 %v1031, %v1025
    %v1050 = vpack.c.b16 %v1032, %v1026
    %v1051 = vpack.c.b16 %v1033, %v1027
    %v1052 = vpack.c.b16 %v1034, %v1034
    %v1053 = vpack.c.b16 %v1035, %v1035
    %v1054 = vpack.c.b16 %v1036, %v1036
    %v1055 = vpack.c.b16 %v1037, %v1037
    %v1056 = vpack.c.b16 %v1038, %v1038
    %v1057 = vpack.c.b16 %v1039, %v1039
    %v1268 = vunpack.c.l.b16 %v803
    %v1269 = vunpack.c.h.b16 %v803
    %v1270 = vunpack.c.l.b16 %v804
    %v1271 = vunpack.c.h.b16 %v804
    %v1272 = vunpack.c.l.b16 %v805
    %v1273 = vunpack.c.h.b16 %v805
    %v1274 = vunpack.c.l.b16 %v806
    %v1275 = vunpack.c.h.b16 %v806
    %v1276 = vunpack.c.l.b16 %v807
    %v1277 = vunpack.c.h.b16 %v807
    %v1278 = vunpack.c.l.b16 %v808
    %v1279 = vunpack.c.h.b16 %v808
    %v1280 = vunpack.c.l.b16 %v809
    %v1281 = vunpack.c.h.b16 %v809
    %v1282 = vunpack.c.l.b16 %v810
    %v1283 = vunpack.c.h.b16 %v810
    %v1284 = vunpack.c.l.b16 %v811
    %v1285 = vunpack.c.h.b16 %v811
    %v1286 = vunpack.c.l.b16 %v812
    %v1287 = vunpack.c.h.b16 %v812
    %v1288 = vunpack.c.l.b16 %v813
    %v1289 = vunpack.c.h.b16 %v813
    %v1290 = vunpack.c.l.b16 %v814
    %v1291 = vunpack.c.h.b16 %v814
    %v1292 = vunpack.c.l.b16 %v815
    %v1293 = vunpack.c.h.b16 %v815
    %v1294 = vunpack.c.l.b16 %v816
    %v1295 = vunpack.c.h.b16 %v816
    %v1296 = vunpack.c.l.b16 %v817
    %v1297 = vunpack.c.h.b16 %v817
    %v1298 = vunpack.c.l.b16 %v818
    %v1299 = vunpack.c.h.b16 %v818
    %v1300 = vunpack.c.l.b16 %v819
    %v1301 = vunpack.c.h.b16 %v819
    %v1302 = vunpack.c.l.b16 %v820
    %v1303 = vunpack.c.h.b16 %v820
    %v1304 = vunpack.c.l.b16 %v821
    %v1305 = vunpack.c.h.b16 %v821
    %v1306 = vunpack.c.l.b16 %v822
    %v1307 = vunpack.c.h.b16 %v822
    %v1308 = vunpack.c.l.b16 %v823
    %v1309 = vunpack.c.h.b16 %v823
    %v1310 = vunpack.c.l.b16 %v824
    %v1311 = vunpack.c.h.b16 %v824
    %v1312 = vunpack.c.l.b16 %v825
    %v1313 = vunpack.c.h.b16 %v825
    %v1314 = vunpack.c.l.b16 %v826
    %v1315 = vunpack.c.h.b16 %v826
    %v1316 = vunpack.c.l.b16 %v827
    %v1317 = vunpack.c.h.b16 %v827
    %v1318 = vunpack.c.l.b16 %v828
    %v1319 = vunpack.c.h.b16 %v828
    %v1320 = vunpack.c.l.b16 %v829
    %v1321 = vunpack.c.h.b16 %v829
    %v1322 = vunpack.c.l.b16 %v830
    %v1323 = vunpack.c.h.b16 %v830
    %v1324 = vunpack.c.l.b16 %v831
    %v1325 = vunpack.c.h.b16 %v831
    %v1326 = vunpack.c.l.b16 %v832
    %v1327 = vunpack.c.h.b16 %v832
    %v1328 = vunpack.c.l.b16 %v833
    %v1329 = vunpack.c.h.b16 %v833
    %v1330 = vunpack.c.l.b16 %v834
    %v1331 = vunpack.c.h.b16 %v834
    %v1332 = vunpack.c.l.b16 %v835
    %v1333 = vunpack.c.h.b16 %v835
    %v1334 = vunpack.c.l.b16 %v836
    %v1335 = vunpack.c.h.b16 %v836
    %v1336 = vunpack.c.l.b16 %v837
    %v1337 = vunpack.c.h.b16 %v837
    %v1338 = vunpack.c.l.b16 %v838
    %v1339 = vunpack.c.h.b16 %v838
    %v1340 = vunpack.c.l.b16 %v839
    %v1341 = vunpack.c.h.b16 %v839
    %v1342 = vunpack.c.l.b16 %v840
    %v1343 = vunpack.c.h.b16 %v840
    %v1344 = vunpack.c.l.b16 %v841
    %v1345 = vunpack.c.h.b16 %v841
    %v1346 = vunpack.c.l.b16 %v842
    %v1347 = vunpack.c.h.b16 %v842
    %v1348 = vunpack.c.l.b16 %v843
    %v1349 = vunpack.c.h.b16 %v843
    %v1350 = vunpack.c.l.b16 %v844
    %v1351 = vunpack.c.h.b16 %v844
    %v1352 = vunpack.c.l.b16 %v845
    %v1353 = vunpack.c.h.b16 %v845
    %v1354 = vunpack.c.l.b16 %v846
    %v1355 = vunpack.c.h.b16 %v846
    %v1356 = vunpack.c.l.b16 %v847
    %v1357 = vunpack.c.h.b16 %v847
    %v1358 = vunpack.c.l.b16 %v848
    %v1359 = vunpack.c.h.b16 %v848
    %v1360 = vunpack.c.l.b16 %v849
    %v1361 = vunpack.c.h.b16 %v849
    %v1362 = vunpack.c.l.b16 %v850
    %v1363 = vunpack.c.h.b16 %v850
    %v1364 = vunpack.c.l.b16 %v851
    %v1365 = vunpack.c.h.b16 %v851
    %v1366 = vunpack.c.l.b16 %v852
    %v1367 = vunpack.c.h.b16 %v852
    %v1368 = vunpack.c.l.b16 %v853
    %v1369 = vunpack.c.h.b16 %v853
    %v1370 = vunpack.c.l.b16 %v854
    %v1371 = vunpack.c.h.b16 %v854
    %v1372 = vunpack.c.l.b16 %v855
    %v1373 = vunpack.c.h.b16 %v855
    %v1374 = vunpack.c.l.b16 %v856
    %v1375 = vunpack.c.h.b16 %v856
    %v1376 = vunpack.c.l.b16 %v857
    %v1377 = vunpack.c.h.b16 %v857
    %v1378 = vunpack.c.l.b16 %v858
    %v1379 = vunpack.c.h.b16 %v858
    %v1380 = vunpack.c.l.b16 %v859
    %v1381 = vunpack.c.h.b16 %v859
    %v1382 = vunpack.c.l.b16 %v860
    %v1383 = vunpack.c.h.b16 %v860
    %v1384 = vunpack.c.l.b16 %v861
    %v1385 = vunpack.c.h.b16 %v861
    %v1386 = vunpack.c.l.b16 %v862
    %v1387 = vunpack.c.h.b16 %v862
    %v1388 = vunpack.c.l.b16 %v863
    %v1389 = vunpack.c.h.b16 %v863
    %v1390 = vunpack.c.l.b16 %v864
    %v1391 = vunpack.c.h.b16 %v864
    %v1392 = vunpack.c.l.b16 %v865
    %v1393 = vunpack.c.h.b16 %v865
    %v1394 = vunpack.c.l.b16 %v866
    %v1395 = vunpack.c.h.b16 %v866
    %v1396 = vunpack.c.l.b16 %v867
    %v1397 = vunpack.c.h.b16 %v867
    %v1398 = vunpack.c.l.b16 %v868
    %v1399 = vunpack.c.h.b16 %v868
    %v1400 = vunpack.c.l.b16 %v869
    %v1401 = vunpack.c.h.b16 %v869
    %v1402 = vunpack.c.l.b16 %v870
    %v1403 = vunpack.c.h.b16 %v870
    %v1404 = vunpack.c.l.b16 %v871
    %v1405 = vunpack.c.h.b16 %v871
    %v1406 = vunpack.c.l.b16 %v872
    %v1407 = vunpack.c.h.b16 %v872
    %v1408 = vunpack.c.l.b16 %v873
    %v1409 = vunpack.c.h.b16 %v873
    %v1410 = vunpack.c.l.b16 %v874
    %v1411 = vunpack.c.h.b16 %v874
    %v1412 = vunpack.c.l.b16 %v875
    %v1413 = vunpack.c.h.b16 %v875
    %v1414 = vunpack.c.l.b16 %v876
    %v1415 = vunpack.c.h.b16 %v876
    %v1416 = vunpack.c.l.b16 %v877
    %v1417 = vunpack.c.h.b16 %v877
    %v1418 = vunpack.c.l.b16 %v878
    %v1419 = vunpack.c.h.b16 %v878
    %v1420 = vunpack.c.l.b16 %v879
    %v1421 = vunpack.c.h.b16 %v879
    %v1422 = vunpack.c.l.b16 %v880
    %v1423 = vunpack.c.h.b16 %v880
    %v1424 = vunpack.c.l.b16 %v881
    %v1425 = vunpack.c.h.b16 %v881
    %v1426 = vunpack.c.l.b16 %v882
    %v1427 = vunpack.c.h.b16 %v882
    %v1428 = vunpack.c.l.b16 %v883
    %v1429 = vunpack.c.h.b16 %v883
    %v1430 = vunpack.c.l.b16 %v884
    %v1431 = vunpack.c.h.b16 %v884
    %v1432 = vunpack.c.l.b16 %v885
    %v1433 = vunpack.c.h.b16 %v885
    %v1434 = vunpack.c.l.b16 %v886
    %v1435 = vunpack.c.h.b16 %v886
    %v1436 = vunpack.c.l.b16 %v887
    %v1437 = vunpack.c.h.b16 %v887
    %v1438 = vunpack.c.l.b16 %v888
    %v1439 = vunpack.c.h.b16 %v888
    %v1440 = vunpack.c.l.b16 %v889
    %v1441 = vunpack.c.h.b16 %v889
    %v1442 = vunpack.c.l.b16 %v890
    %v1443 = vunpack.c.h.b16 %v890
    %v1444 = vunpack.c.l.b16 %v891
    %v1445 = vunpack.c.h.b16 %v891
    %v1446 = vunpack.c.l.b16 %v892
    %v1447 = vunpack.c.h.b16 %v892
    %v1448 = vunpack.c.l.b16 %v893
    %v1449 = vunpack.c.h.b16 %v893
    %v1450 = vunpack.c.l.b16 %v894
    %v1451 = vunpack.c.h.b16 %v894
    %v1452 = vunpack.c.l.b16 %v895
    %v1453 = vunpack.c.h.b16 %v895
    %v1454 = vunpack.c.l.b16 %v896
    %v1455 = vunpack.c.h.b16 %v896
    %v1456 = vunpack.c.l.b16 %v897
    %v1457 = vunpack.c.h.b16 %v897
    %v1458 = vunpack.c.l.b16 %v898
    %v1459 = vunpack.c.h.b16 %v898
    %v1460 = vunpack.c.l.b16 %v899
    %v1461 = vunpack.c.h.b16 %v899
    %v1462 = vunpack.c.l.b16 %v900
    %v1463 = vunpack.c.h.b16 %v900
    %v1464 = vunpack.c.l.b16 %v901
    %v1465 = vunpack.c.h.b16 %v901
    %v1466 = vunpack.c.l.b16 %v902
    %v1467 = vunpack.c.h.b16 %v902
    %v1468 = vunpack.c.l.b16 %v903
    %v1469 = vunpack.c.h.b16 %v903
    %v1470 = vunpack.c.l.b16 %v904
    %v1471 = vunpack.c.h.b16 %v904
    %v1472 = vunpack.c.l.b16 %v905
    %v1473 = vunpack.c.h.b16 %v905
    %v1474 = vunpack.c.l.b16 %v906
    %v1475 = vunpack.c.h.b16 %v906
    %v1476 = vunpack.c.l.b16 %v907
    %v1477 = vunpack.c.h.b16 %v907
    %v1478 = vunpack.c.l.b16 %v908
    %v1479 = vunpack.c.h.b16 %v908
    %v1480 = vunpack.c.l.b16 %v909
    %v1481 = vunpack.c.h.b16 %v909
    %v1482 = vunpack.c.l.b16 %v910
    %v1483 = vunpack.c.h.b16 %v910
    %v1484 = vunpack.c.l.b16 %v911
    %v1485 = vunpack.c.h.b16 %v911
    %v1486 = vunpack.c.l.b16 %v912
    %v1487 = vunpack.c.h.b16 %v912
    %v1488 = vunpack.c.l.b16 %v913
    %v1489 = vunpack.c.h.b16 %v913
    %v1490 = vunpack.c.l.b16 %v914
    %v1491 = vunpack.c.h.b16 %v914
    %v1492 = vunpack.c.l.b16 %v915
    %v1493 = vunpack.c.h.b16 %v915
    %v1494 = vunpack.c.l.b16 %v916
    %v1495 = vunpack.c.h.b16 %v916
    %v1496 = vunpack.c.l.b16 %v917
    %v1497 = vunpack.c.h.b16 %v917
    %v1498 = vunpack.c.l.b16 %v918
    %v1499 = vunpack.c.h.b16 %v918
    %v1500 = vunpack.c.l.b16 %v919
    %v1501 = vunpack.c.h.b16 %v919
    %v1502 = vunpack.c.l.b16 %v920
    %v1503 = vunpack.c.h.b16 %v920
    %v1504 = vunpack.c.l.b16 %v921
    %v1505 = vunpack.c.h.b16 %v921
    %v1506 = vunpack.c.l.b16 %v922
    %v1507 = vunpack.c.h.b16 %v922
    %v1508 = vunpack.c.l.b16 %v923
    %v1509 = vunpack.c.h.b16 %v923
    %v1510 = vunpack.c.l.b16 %v924
    %v1511 = vunpack.c.h.b16 %v924
    %v1512 = vunpack.c.l.b16 %v925
    %v1513 = vunpack.c.h.b16 %v925
    %v1514 = vunpack.c.l.b16 %v926
    %v1515 = vunpack.c.h.b16 %v926
    %v1516 = vunpack.c.l.b16 %v927
    %v1517 = vunpack.c.h.b16 %v927
    %v1518 = vunpack.c.l.b16 %v928
    %v1519 = vunpack.c.h.b16 %v928
    %v1520 = vunpack.c.l.b16 %v929
    %v1521 = vunpack.c.h.b16 %v929
    %v1522 = vunpack.c.l.b16 %v930
    %v1523 = vunpack.c.h.b16 %v930
    %v1524 = vunpack.c.l.b16 %v931
    %v1525 = vunpack.c.h.b16 %v931
    %v1526 = vunpack.c.l.b16 %v932
    %v1527 = vunpack.c.h.b16 %v932
    %v1528 = vunpack.c.l.b16 %v933
    %v1529 = vunpack.c.h.b16 %v933
    %v1530 = vunpack.c.l.b16 %v934
    %v1531 = vunpack.c.h.b16 %v934
    %v1532 = vunpack.c.l.b16 %v935
    %v1533 = vunpack.c.h.b16 %v935
    %v1534 = vunpack.c.l.b16 %v936
    %v1535 = vunpack.c.h.b16 %v936
    %v1536 = vunpack.c.l.b16 %v937
    %v1537 = vunpack.c.h.b16 %v937
    %v1538 = vunpack.c.l.b16 %v938
    %v1539 = vunpack.c.h.b16 %v938
    %v1540 = vunpack.c.l.b16 %v939
    %v1541 = vunpack.c.h.b16 %v939
    %v1542 = vunpack.c.l.b16 %v940
    %v1543 = vunpack.c.h.b16 %v940
    %v1544 = vunpack.c.l.b16 %v941
    %v1545 = vunpack.c.h.b16 %v941
    %v1546 = vunpack.c.l.b16 %v942
    %v1547 = vunpack.c.h.b16 %v942
    %v1548 = vunpack.c.l.b16 %v943
    %v1549 = vunpack.c.h.b16 %v943
    %v1550 = vunpack.c.l.b16 %v944
    %v1551 = vunpack.c.h.b16 %v944
    %v1552 = vunpack.c.l.b16 %v945
    %v1553 = vunpack.c.h.b16 %v945
    %v1554 = vunpack.c.l.b16 %v946
    %v1555 = vunpack.c.h.b16 %v946
    %v1556 = vunpack.c.l.b16 %v947
    %v1557 = vunpack.c.h.b16 %v947
    %v1558 = vunpack.c.l.b16 %v948
    %v1559 = vunpack.c.h.b16 %v948
    %v1560 = vunpack.c.l.b16 %v949
    %v1561 = vunpack.c.h.b16 %v949
    %v1562 = vunpack.c.l.b16 %v950
    %v1563 = vunpack.c.h.b16 %v950
    %v1564 = vunpack.c.l.b16 %v951
    %v1565 = vunpack.c.h.b16 %v951
    %v1566 = vunpack.c.l.b16 %v952
    %v1567 = vunpack.c.h.b16 %v952
    %v1568 = vunpack.c.l.b16 %v953
    %v1569 = vunpack.c.h.b16 %v953
    %v1570 = vunpack.c.l.b16 %v954
    %v1571 = vunpack.c.h.b16 %v954
    %v1572 = vunpack.c.l.b16 %v955
    %v1573 = vunpack.c.h.b16 %v955
    %v1574 = vunpack.c.l.b16 %v956
    %v1575 = vunpack.c.h.b16 %v956
    %v1576 = vunpack.c.l.b16 %v957
    %v1577 = vunpack.c.h.b16 %v957
    %v1578 = vunpack.c.l.b16 %v958
    %v1579 = vunpack.c.h.b16 %v958
    %v1580 = vunpack.c.l.b16 %v959
    %v1581 = vunpack.c.h.b16 %v959
    %v1582 = vunpack.c.l.b16 %v960
    %v1583 = vunpack.c.h.b16 %v960
    %v1584 = vunpack.c.l.b16 %v961
    %v1585 = vunpack.c.h.b16 %v961
    %v1586 = vunpack.c.l.b16 %v962
    %v1587 = vunpack.c.h.b16 %v962
    %v1588 = vunpack.c.l.b16 %v963
    %v1589 = vunpack.c.h.b16 %v963
    %v1590 = vunpack.c.l.b16 %v964
    %v1591 = vunpack.c.h.b16 %v964
    %v1592 = vunpack.c.l.b16 %v965
    %v1593 = vunpack.c.h.b16 %v965
    %v1594 = vunpack.c.l.b16 %v966
    %v1595 = vunpack.c.h.b16 %v966
    %v1596 = vunpack.c.l.b16 %v967
    %v1597 = vunpack.c.h.b16 %v967
    %v1598 = vunpack.c.l.b16 %v968
    %v1599 = vunpack.c.h.b16 %v968
    %v1600 = vunpack.c.l.b16 %v969
    %v1601 = vunpack.c.h.b16 %v969
    %v1602 = vunpack.c.l.b16 %v970
    %v1603 = vunpack.c.h.b16 %v970
    %v1604 = vunpack.c.l.b16 %v971
    %v1605 = vunpack.c.h.b16 %v971
    %v1606 = vunpack.c.l.b16 %v972
    %v1607 = vunpack.c.h.b16 %v972
    %v1608 = vunpack.c.l.b16 %v973
    %v1609 = vunpack.c.h.b16 %v973
    %v1610 = vunpack.c.l.b16 %v974
    %v1611 = vunpack.c.h.b16 %v974
    %v1612 = vunpack.c.l.b16 %v975
    %v1613 = vunpack.c.h.b16 %v975
    %v1614 = vunpack.c.l.b16 %v976
    %v1615 = vunpack.c.h.b16 %v976
    %v1616 = vunpack.c.l.b16 %v977
    %v1617 = vunpack.c.h.b16 %v977
    %v1618 = vunpack.c.l.b16 %v978
    %v1619 = vunpack.c.h.b16 %v978
    %v1620 = vunpack.c.l.b16 %v979
    %v1621 = vunpack.c.h.b16 %v979
    %v1622 = vunpack.c.l.b16 %v980
    %v1623 = vunpack.c.h.b16 %v980
    %v1624 = vunpack.c.l.b16 %v981
    %v1625 = vunpack.c.h.b16 %v981
    %v1626 = vunpack.c.l.b16 %v982
    %v1627 = vunpack.c.h.b16 %v982
    %v1628 = vunpack.c.l.b16 %v983
    %v1629 = vunpack.c.h.b16 %v983
    %v1630 = vunpack.c.l.b16 %v984
    %v1631 = vunpack.c.h.b16 %v984
    %v1632 = vunpack.c.l.b16 %v985
    %v1633 = vunpack.c.h.b16 %v985
    %v1634 = vunpack.c.l.b16 %v986
    %v1635 = vunpack.c.h.b16 %v986
    %v1636 = vunpack.c.l.b16 %v987
    %v1637 = vunpack.c.h.b16 %v987
    %v1638 = vunpack.c.l.b16 %v988
    %v1639 = vunpack.c.h.b16 %v988
    %v1640 = vunpack.c.l.b16 %v989
    %v1641 = vunpack.c.h.b16 %v989
    %v1642 = vunpack.c.l.b16 %v990
    %v1643 = vunpack.c.h.b16 %v990
    %v1644 = vunpack.c.l.b16 %v991
    %v1645 = vunpack.c.h.b16 %v991
    %v1646 = vunpack.c.l.b16 %v992
    %v1647 = vunpack.c.h.b16 %v992
    %v1648 = vunpack.c.l.b16 %v993
    %v1649 = vunpack.c.h.b16 %v993
    %v1650 = vunpack.c.l.b16 %v994
    %v1651 = vunpack.c.h.b16 %v994
    %v1652 = vpack.c.b16 %v1272, %v1268
    %v1653 = vpack.c.b16 %v1273, %v1269
    %v1654 = vpack.c.b16 %v1274, %v1270
    %v1655 = vpack.c.b16 %v1275, %v1271
    %v1656 = vpack.c.b16 %v1280, %v1276
    %v1657 = vpack.c.b16 %v1281, %v1277
    %v1658 = vpack.c.b16 %v1282, %v1278
    %v1659 = vpack.c.b16 %v1283, %v1279
    %v1660 = vpack.c.b16 %v1288, %v1284
    %v1661 = vpack.c.b16 %v1289, %v1285
    %v1662 = vpack.c.b16 %v1290, %v1286
    %v1663 = vpack.c.b16 %v1291, %v1287
    %v1664 = vpack.c.b16 %v1296, %v1292
    %v1665 = vpack.c.b16 %v1297, %v1293
    %v1666 = vpack.c.b16 %v1298, %v1294
    %v1667 = vpack.c.b16 %v1299, %v1295
    %v1668 = vpack.c.b16 %v1304, %v1300
    %v1669 = vpack.c.b16 %v1305, %v1301
    %v1670 = vpack.c.b16 %v1306, %v1302
    %v1671 = vpack.c.b16 %v1307, %v1303
    %v1672 = vpack.c.b16 %v1312, %v1308
    %v1673 = vpack.c.b16 %v1313, %v1309
    %v1674 = vpack.c.b16 %v1314, %v1310
    %v1675 = vpack.c.b16 %v1315, %v1311
    %v1676 = vpack.c.b16 %v1320, %v1316
    %v1677 = vpack.c.b16 %v1321, %v1317
    %v1678 = vpack.c.b16 %v1322, %v1318
    %v1679 = vpack.c.b16 %v1323, %v1319
    %v1680 = vpack.c.b16 %v1328, %v1324
    %v1681 = vpack.c.b16 %v1329, %v1325
    %v1682 = vpack.c.b16 %v1330, %v1326
    %v1683 = vpack.c.b16 %v1331, %v1327
    %v1684 = vpack.c.b16 %v1336, %v1332
    %v1685 = vpack.c.b16 %v1337, %v1333
    %v1686 = vpack.c.b16 %v1338, %v1334
    %v1687 = vpack.c.b16 %v1339, %v1335
    %v1688 = vpack.c.b16 %v1344, %v1340
    %v1689 = vpack.c.b16 %v1345, %v1341
    %v1690 = vpack.c.b16 %v1346, %v1342
    %v1691 = vpack.c.b16 %v1347, %v1343
    %v1692 = vpack.c.b16 %v1352, %v1348
    %v1693 = vpack.c.b16 %v1353, %v1349
    %v1694 = vpack.c.b16 %v1354, %v1350
    %v1695 = vpack.c.b16 %v1355, %v1351
    %v1696 = vpack.c.b16 %v1360, %v1356
    %v1697 = vpack.c.b16 %v1361, %v1357
    %v1698 = vpack.c.b16 %v1362, %v1358
    %v1699 = vpack.c.b16 %v1363, %v1359
    %v1700 = vpack.c.b16 %v1368, %v1364
    %v1701 = vpack.c.b16 %v1369, %v1365
    %v1702 = vpack.c.b16 %v1370, %v1366
    %v1703 = vpack.c.b16 %v1371, %v1367
    %v1704 = vpack.c.b16 %v1376, %v1372
    %v1705 = vpack.c.b16 %v1377, %v1373
    %v1706 = vpack.c.b16 %v1378, %v1374
    %v1707 = vpack.c.b16 %v1379, %v1375
    %v1708 = vpack.c.b16 %v1384, %v1380
    %v1709 = vpack.c.b16 %v1385, %v1381
    %v1710 = vpack.c.b16 %v1386, %v1382
    %v1711 = vpack.c.b16 %v1387, %v1383
    %v1712 = vpack.c.b16 %v1392, %v1388
    %v1713 = vpack.c.b16 %v1393, %v1389
    %v1714 = vpack.c.b16 %v1394, %v1390
    %v1715 = vpack.c.b16 %v1395, %v1391
    %v1716 = vpack.c.b16 %v1400, %v1396
    %v1717 = vpack.c.b16 %v1401, %v1397
    %v1718 = vpack.c.b16 %v1402, %v1398
    %v1719 = vpack.c.b16 %v1403, %v1399
    %v1720 = vpack.c.b16 %v1408, %v1404
    %v1721 = vpack.c.b16 %v1409, %v1405
    %v1722 = vpack.c.b16 %v1410, %v1406
    %v1723 = vpack.c.b16 %v1411, %v1407
    %v1724 = vpack.c.b16 %v1416, %v1412
    %v1725 = vpack.c.b16 %v1417, %v1413
    %v1726 = vpack.c.b16 %v1418, %v1414
    %v1727 = vpack.c.b16 %v1419, %v1415
    %v1728 = vpack.c.b16 %v1424, %v1420
    %v1729 = vpack.c.b16 %v1425, %v1421
    %v1730 = vpack.c.b16 %v1426, %v1422
    %v1731 = vpack.c.b16 %v1427, %v1423
    %v1732 = vpack.c.b16 %v1432, %v1428
    %v1733 = vpack.c.b16 %v1433, %v1429
    %v1734 = vpack.c.b16 %v1434, %v1430
    %v1735 = vpack.c.b16 %v1435, %v1431
    %v1736 = vpack.c.b16 %v1440, %v1436
    %v1737 = vpack.c.b16 %v1441, %v1437
    %v1738 = vpack.c.b16 %v1442, %v1438
    %v1739 = vpack.c.b16 %v1443, %v1439
    %v1740 = vpack.c.b16 %v1448, %v1444
    %v1741 = vpack.c.b16 %v1449, %v1445
    %v1742 = vpack.c.b16 %v1450, %v1446
    %v1743 = vpack.c.b16 %v1451, %v1447
    %v1744 = vpack.c.b16 %v1456, %v1452
    %v1745 = vpack.c.b16 %v1457, %v1453
    %v1746 = vpack.c.b16 %v1458, %v1454
    %v1747 = vpack.c.b16 %v1459, %v1455
    %v1748 = vpack.c.b16 %v1464, %v1460
    %v1749 = vpack.c.b16 %v1465, %v1461
    %v1750 = vpack.c.b16 %v1466, %v1462
    %v1751 = vpack.c.b16 %v1467, %v1463
    %v1752 = vpack.c.b16 %v1472, %v1468
    %v1753 = vpack.c.b16 %v1473, %v1469
    %v1754 = vpack.c.b16 %v1474, %v1470
    %v1755 = vpack.c.b16 %v1475, %v1471
    %v1756 = vpack.c.b16 %v1480, %v1476
    %v1757 = vpack.c.b16 %v1481, %v1477
    %v1758 = vpack.c.b16 %v1482, %v1478
    %v1759 = vpack.c.b16 %v1483, %v1479
    %v1760 = vpack.c.b16 %v1488, %v1484
    %v1761 = vpack.c.b16 %v1489, %v1485
    %v1762 = vpack.c.b16 %v1490, %v1486
    %v1763 = vpack.c.b16 %v1491, %v1487
    %v1764 = vpack.c.b16 %v1496, %v1492
    %v1765 = vpack.c.b16 %v1497, %v1493
    %v1766 = vpack.c.b16 %v1498, %v1494
    %v1767 = vpack.c.b16 %v1499, %v1495
    %v1768 = vpack.c.b16 %v1504, %v1500
    %v1769 = vpack.c.b16 %v1505, %v1501
    %v1770 = vpack.c.b16 %v1506, %v1502
    %v1771 = vpack.c.b16 %v1507, %v1503
    %v1772 = vpack.c.b16 %v1512, %v1508
    %v1773 = vpack.c.b16 %v1513, %v1509
    %v1774 = vpack.c.b16 %v1514, %v1510
    %v1775 = vpack.c.b16 %v1515, %v1511
    %v1776 = vpack.c.b16 %v1520, %v1516
    %v1777 = vpack.c.b16 %v1521, %v1517
    %v1778 = vpack.c.b16 %v1522, %v1518
    %v1779 = vpack.c.b16 %v1523, %v1519
    %v1780 = vpack.c.b16 %v1528, %v1524
    %v1781 = vpack.c.b16 %v1529, %v1525
    %v1782 = vpack.c.b16 %v1530, %v1526
    %v1783 = vpack.c.b16 %v1531, %v1527
    %v1784 = vpack.c.b16 %v1536, %v1532
    %v1785 = vpack.c.b16 %v1537, %v1533
    %v1786 = vpack.c.b16 %v1538, %v1534
    %v1787 = vpack.c.b16 %v1539, %v1535
    %v1788 = vpack.c.b16 %v1544, %v1540
    %v1789 = vpack.c.b16 %v1545, %v1541
    %v1790 = vpack.c.b16 %v1546, %v1542
    %v1791 = vpack.c.b16 %v1547, %v1543
    %v1792 = vpack.c.b16 %v1552, %v1548
    %v1793 = vpack.c.b16 %v1553, %v1549
    %v1794 = vpack.c.b16 %v1554, %v1550
    %v1795 = vpack.c.b16 %v1555, %v1551
    %v1796 = vpack.c.b16 %v1560, %v1556
    %v1797 = vpack.c.b16 %v1561, %v1557
    %v1798 = vpack.c.b16 %v1562, %v1558
    %v1799 = vpack.c.b16 %v1563, %v1559
    %v1800 = vpack.c.b16 %v1568, %v1564
    %v1801 = vpack.c.b16 %v1569, %v1565
    %v1802 = vpack.c.b16 %v1570, %v1566
    %v1803 = vpack.c.b16 %v1571, %v1567
    %v1804 = vpack.c.b16 %v1576, %v1572
    %v1805 = vpack.c.b16 %v1577, %v1573
    %v1806 = vpack.c.b16 %v1578, %v1574
    %v1807 = vpack.c.b16 %v1579, %v1575
    %v1808 = vpack.c.b16 %v1584, %v1580
    %v1809 = vpack.c.b16 %v1585, %v1581
    %v1810 = vpack.c.b16 %v1586, %v1582
    %v1811 = vpack.c.b16 %v1587, %v1583
    %v1812 = vpack.c.b16 %v1592, %v1588
    %v1813 = vpack.c.b16 %v1593, %v1589
    %v1814 = vpack.c.b16 %v1594, %v1590
    %v1815 = vpack.c.b16 %v1595, %v1591
    %v1816 = vpack.c.b16 %v1600, %v1596
    %v1817 = vpack.c.b16 %v1601, %v1597
    %v1818 = vpack.c.b16 %v1602, %v1598
    %v1819 = vpack.c.b16 %v1603, %v1599
    %v1820 = vpack.c.b16 %v1608, %v1604
    %v1821 = vpack.c.b16 %v1609, %v1605
    %v1822 = vpack.c.b16 %v1610, %v1606
    %v1823 = vpack.c.b16 %v1611, %v1607
    %v1824 = vpack.c.b16 %v1616, %v1612
    %v1825 = vpack.c.b16 %v1617, %v1613
    %v1826 = vpack.c.b16 %v1618, %v1614
    %v1827 = vpack.c.b16 %v1619, %v1615
    %v1828 = vpack.c.b16 %v1624, %v1620
    %v1829 = vpack.c.b16 %v1625, %v1621
    %v1830 = vpack.c.b16 %v1626, %v1622
    %v1831 = vpack.c.b16 %v1627, %v1623
    %v1832 = vpack.c.b16 %v1632, %v1628
    %v1833 = vpack.c.b16 %v1633, %v1629
    %v1834 = vpack.c.b16 %v1634, %v1630
    %v1835 = vpack.c.b16 %v1635, %v1631
    %v1836 = vpack.c.b16 %v1640, %v1636
    %v1837 = vpack.c.b16 %v1641, %v1637
    %v1838 = vpack.c.b16 %v1642, %v1638
    %v1839 = vpack.c.b16 %v1643, %v1639
    %v1840 = vpack.c.b16 %v1648, %v1644
    %v1841 = vpack.c.b16 %v1649, %v1645
    %v1842 = vpack.c.b16 %v1650, %v1646
    %v1843 = vpack.c.b16 %v1651, %v1647
    %2036 = vmatprep.subr.bf16.mxu0 %v1653
    %2037 = vmatpush1.bf16.msra.mxu0 %v1652
    %2038 = vmatprep.subr.bf16.mxu0 %v1657
    %2039 = vmatpush1.bf16.msra.mxu0 %v1656
    %2040 = vmatprep.subr.bf16.mxu0 %v1661
    %2041 = vmatpush1.bf16.msra.mxu0 %v1660
    %2042 = vmatprep.subr.bf16.mxu0 %v1665
    %2043 = vmatpush1.bf16.msra.mxu0 %v1664
    %2044 = vmatprep.subr.bf16.mxu0 %v1669
    %2045 = vmatpush1.bf16.msra.mxu0 %v1668
    %2046 = vmatprep.subr.bf16.mxu0 %v1673
    %2047 = vmatpush1.bf16.msra.mxu0 %v1672
    %2048 = vmatprep.subr.bf16.mxu0 %v1677
    %2049 = vmatpush1.bf16.msra.mxu0 %v1676
    %2050 = vmatprep.subr.bf16.mxu0 %v1681
    %2051 = vmatpush1.bf16.msra.mxu0 %v1680
    %2052 = vmatprep.subr.bf16.mxu0 %v1685
    %2053 = vmatpush1.bf16.msra.mxu0 %v1684
    %2054 = vmatprep.subr.bf16.mxu0 %v1689
    %2055 = vmatpush1.bf16.msra.mxu0 %v1688
    %2056 = vmatprep.subr.bf16.mxu0 %v1693
    %2057 = vmatpush1.bf16.msra.mxu0 %v1692
    %2058 = vmatprep.subr.bf16.mxu0 %v1697
    %2059 = vmatpush1.bf16.msra.mxu0 %v1696
    %2060 = vmatprep.subr.bf16.mxu0 %v1701
    %2061 = vmatpush1.bf16.msra.mxu0 %v1700
    %2062 = vmatprep.subr.bf16.mxu0 %v1705
    %2063 = vmatpush1.bf16.msra.mxu0 %v1704
    %2064 = vmatprep.subr.bf16.mxu0 %v1709
    %2065 = vmatpush1.bf16.msra.mxu0 %v1708
    %2066 = vmatprep.subr.bf16.mxu0 %v1713
    %2067 = vmatpush1.bf16.msra.mxu0 %v1712
    %2068 = vmatprep.mubr.bf16.mxu0 %v1041
    %2069 = vmatmul.mubr.bf16.gmra.mrb[0].mxu0 %v1040
    %v2070 = vpop.f32.mrb[0].mxu0
    %v2071 = vadd.f32 0.0, %v2070
    %v2072 = vpop.f32.mrb[0].mxu0
    %v2073 = vadd.f32 0.0, %v2072
    %v2074 = vpop.f32.mrb[0].mxu0
    %v2075 = vadd.f32 0.0, %v2074
    %v2076 = vpop.f32.mrb[0].mxu0
    %v2077 = vadd.f32 0.0, %v2076
    %2078 = vmatprep.mubr.bf16.mxu0 %v1047
    %2079 = vmatmul.mubr.bf16.gmra.mrb[0].mxu0 %v1046
    %v2080 = vpop.f32.mrb[0].mxu0
    %v2081 = vadd.f32 0.0, %v2080
    %v2082 = vpop.f32.mrb[0].mxu0
    %v2083 = vadd.f32 0.0, %v2082
    %v2084 = vpop.f32.mrb[0].mxu0
    %v2085 = vadd.f32 0.0, %v2084
    %v2086 = vpop.f32.mrb[0].mxu0
    %v2087 = vadd.f32 0.0, %v2086
    %2088 = vmatprep.mubr.bf16.mxu0 %v1053
    %2089 = vmatmul.mubr.bf16.gmra.mrb[0].mxu0 %v1052
    %v2090 = vpop.f32.mrb[0].mxu0
    %v2091 = vpop.f32.mrb[0].mxu0
    %v2092 = vadd.f32 0.0, %v2091
    %v2093 = vpop.f32.mrb[0].mxu0
    %v2094 = vpop.f32.mrb[0].mxu0
    %2095 = vdwg.mxu0
    %2096 = vmatprep.subr.bf16.mxu0 %v1717
    %2097 = vmatpush1.bf16.msra.mxu0 %v1716
    %2098 = vmatprep.subr.bf16.mxu0 %v1721
    %2099 = vmatpush1.bf16.msra.mxu0 %v1720
    %2100 = vmatprep.subr.bf16.mxu0 %v1725
    %2101 = vmatpush1.bf16.msra.mxu0 %v1724
    %2102 = vmatprep.subr.bf16.mxu0 %v1729
    %2103 = vmatpush1.bf16.msra.mxu0 %v1728
    %2104 = vmatprep.subr.bf16.mxu0 %v1733
    %2105 = vmatpush1.bf16.msra.mxu0 %v1732
    %2106 = vmatprep.subr.bf16.mxu0 %v1737
    %2107 = vmatpush1.bf16.msra.mxu0 %v1736
    %2108 = vmatprep.subr.bf16.mxu0 %v1741
    %2109 = vmatpush1.bf16.msra.mxu0 %v1740
    %2110 = vmatprep.subr.bf16.mxu0 %v1745
    %2111 = vmatpush1.bf16.msra.mxu0 %v1744
    %2112 = vmatprep.subr.bf16.mxu0 %v1749
    %2113 = vmatpush1.bf16.msra.mxu0 %v1748
    %2114 = vmatprep.subr.bf16.mxu0 %v1753
    %2115 = vmatpush1.bf16.msra.mxu0 %v1752
    %2116 = vmatprep.subr.bf16.mxu0 %v1757
    %2117 = vmatpush1.bf16.msra.mxu0 %v1756
    %2118 = vmatprep.subr.bf16.mxu0 %v1761
    %2119 = vmatpush1.bf16.msra.mxu0 %v1760
    %2120 = vmatprep.subr.bf16.mxu0 %v1765
    %2121 = vmatpush1.bf16.msra.mxu0 %v1764
    %2122 = vmatprep.subr.bf16.mxu0 %v1769
    %2123 = vmatpush1.bf16.msra.mxu0 %v1768
    %2124 = vmatprep.subr.bf16.mxu0 %v1773
    %2125 = vmatpush1.bf16.msra.mxu0 %v1772
    %2126 = vmatprep.subr.bf16.mxu0 %v1777
    %2127 = vmatpush1.bf16.msra.mxu0 %v1776
    %2128 = vmatprep.mubr.bf16.mxu0 %v1043
    %2129 = vmatmul.mubr.bf16.gmra.mrb[0].mxu0 %v1042
    %v2130 = vpop.f32.mrb[0].mxu0
    %v2131 = vadd.f32 %v2071, %v2130
    %v2132 = vpop.f32.mrb[0].mxu0
    %v2133 = vadd.f32 %v2073, %v2132
    %v2134 = vpop.f32.mrb[0].mxu0
    %v2135 = vadd.f32 %v2075, %v2134
    %v2136 = vpop.f32.mrb[0].mxu0
    %v2137 = vadd.f32 %v2077, %v2136
    %2138 = vmatprep.mubr.bf16.mxu0 %v1049
    %2139 = vmatmul.mubr.bf16.gmra.mrb[0].mxu0 %v1048
    %v2140 = vpop.f32.mrb[0].mxu0
    %v2141 = vadd.f32 %v2081, %v2140
    %v2142 = vpop.f32.mrb[0].mxu0
    %v2143 = vadd.f32 %v2083, %v2142
    %v2144 = vpop.f32.mrb[0].mxu0
    %v2145 = vadd.f32 %v2085, %v2144
    %v2146 = vpop.f32.mrb[0].mxu0
    %v2147 = vadd.f32 %v2087, %v2146
    %2148 = vmatprep.mubr.bf16.mxu0 %v1055
    %2149 = vmatmul.mubr.bf16.gmra.mrb[0].mxu0 %v1054
    %v2150 = vpop.f32.mrb[0].mxu0
    %v2151 = vpop.f32.mrb[0].mxu0
    %v2152 = vadd.f32 %v2092, %v2151
    %v2153 = vpop.f32.mrb[0].mxu0
    %v2154 = vpop.f32.mrb[0].mxu0
    %2155 = vdwg.mxu0
    %2156 = vmatprep.subr.bf16.mxu0 %v1781
    %2157 = vmatpush1.bf16.msra.mxu0 %v1780
    %2158 = vmatprep.subr.bf16.mxu0 %v1785
    %2159 = vmatpush1.bf16.msra.mxu0 %v1784
    %2160 = vmatprep.subr.bf16.mxu0 %v1789
    %2161 = vmatpush1.bf16.msra.mxu0 %v1788
    %2162 = vmatprep.subr.bf16.mxu0 %v1793
    %2163 = vmatpush1.bf16.msra.mxu0 %v1792
    %2164 = vmatprep.subr.bf16.mxu0 %v1797
    %2165 = vmatpush1.bf16.msra.mxu0 %v1796
    %2166 = vmatprep.subr.bf16.mxu0 %v1801
    %2167 = vmatpush1.bf16.msra.mxu0 %v1800
    %2168 = vmatprep.subr.bf16.mxu0 %v1805
    %2169 = vmatpush1.bf16.msra.mxu0 %v1804
    %2170 = vmatprep.subr.bf16.mxu0 %v1809
    %2171 = vmatpush1.bf16.msra.mxu0 %v1808
    %2172 = vmatprep.subr.bf16.mxu0 %v1813
    %2173 = vmatpush1.bf16.msra.mxu0 %v1812
    %2174 = vmatprep.subr.bf16.mxu0 %v1817
    %2175 = vmatpush1.bf16.msra.mxu0 %v1816
    %2176 = vmatprep.subr.bf16.mxu0 %v1821
    %2177 = vmatpush1.bf16.msra.mxu0 %v1820
    %2178 = vmatprep.subr.bf16.mxu0 %v1825
    %2179 = vmatpush1.bf16.msra.mxu0 %v1824
    %2180 = vmatprep.subr.bf16.mxu0 %v1829
    %2181 = vmatpush1.bf16.msra.mxu0 %v1828
    %2182 = vmatprep.subr.bf16.mxu0 %v1833
    %2183 = vmatpush1.bf16.msra.mxu0 %v1832
    %2184 = vmatprep.subr.bf16.mxu0 %v1837
    %2185 = vmatpush1.bf16.msra.mxu0 %v1836
    %2186 = vmatprep.subr.bf16.mxu0 %v1841
    %2187 = vmatpush1.bf16.msra.mxu0 %v1840
    %2188 = vmatprep.mubr.bf16.mxu0 %v1045
    %2189 = vmatmul.mubr.bf16.gmra.mrb[0].mxu0 %v1044
    %v2190 = vpop.f32.mrb[0].mxu0
    %v2191 = vadd.f32 %v2131, %v2190
    %v2192 = vpop.f32.mrb[0].mxu0
    %v2193 = vadd.f32 %v2133, %v2192
    %v2194 = vpop.f32.mrb[0].mxu0
    %v2195 = vadd.f32 %v2135, %v2194
    %v2196 = vpop.f32.mrb[0].mxu0
    %v2197 = vadd.f32 %v2137, %v2196
    %2198 = vmatprep.mubr.bf16.mxu0 %v1051
    %2199 = vmatmul.mubr.bf16.gmra.mrb[0].mxu0 %v1050
    %v2200 = vpop.f32.mrb[0].mxu0
    %v2201 = vadd.f32 %v2141, %v2200
    %v2202 = vpop.f32.mrb[0].mxu0
    %v2203 = vadd.f32 %v2143, %v2202
    %v2204 = vpop.f32.mrb[0].mxu0
    %v2205 = vadd.f32 %v2145, %v2204
    %v2206 = vpop.f32.mrb[0].mxu0
    %v2207 = vadd.f32 %v2147, %v2206
    %2208 = vmatprep.mubr.bf16.mxu0 %v1057
    %2209 = vmatmul.mubr.bf16.gmra.mrb[0].mxu0 %v1056
    %v2210 = vpop.f32.mrb[0].mxu0
    %v2211 = vpop.f32.mrb[0].mxu0
    %v2212 = vadd.f32 %v2152, %v2211
    %v2213 = vpop.f32.mrb[0].mxu0
    %v2214 = vpop.f32.mrb[0].mxu0
    %2215 = vdwg.mxu0
    %2216 = vmatprep.subr.bf16.mxu0 %v1655
    %2217 = vmatpush1.bf16.msra.mxu0 %v1654
    %2218 = vmatprep.subr.bf16.mxu0 %v1659
    %2219 = vmatpush1.bf16.msra.mxu0 %v1658
    %2220 = vmatprep.subr.bf16.mxu0 %v1663
    %2221 = vmatpush1.bf16.msra.mxu0 %v1662
    %2222 = vmatprep.subr.bf16.mxu0 %v1667
    %2223 = vmatpush1.bf16.msra.mxu0 %v1666
    %2224 = vmatprep.subr.bf16.mxu0 %v1671
    %2225 = vmatpush1.bf16.msra.mxu0 %v1670
    %2226 = vmatprep.subr.bf16.mxu0 %v1675
    %2227 = vmatpush1.bf16.msra.mxu0 %v1674
    %2228 = vmatprep.subr.bf16.mxu0 %v1679
    %2229 = vmatpush1.bf16.msra.mxu0 %v1678
    %2230 = vmatprep.subr.bf16.mxu0 %v1683
    %2231 = vmatpush1.bf16.msra.mxu0 %v1682
    %2232 = vmatprep.subr.bf16.mxu0 %v1687
    %2233 = vmatpush1.bf16.msra.mxu0 %v1686
    %2234 = vmatprep.subr.bf16.mxu0 %v1691
    %2235 = vmatpush1.bf16.msra.mxu0 %v1690
    %2236 = vmatprep.subr.bf16.mxu0 %v1695
    %2237 = vmatpush1.bf16.msra.mxu0 %v1694
    %2238 = vmatprep.subr.bf16.mxu0 %v1699
    %2239 = vmatpush1.bf16.msra.mxu0 %v1698
    %2240 = vmatprep.subr.bf16.mxu0 %v1703
    %2241 = vmatpush1.bf16.msra.mxu0 %v1702
    %2242 = vmatprep.subr.bf16.mxu0 %v1707
    %2243 = vmatpush1.bf16.msra.mxu0 %v1706
    %2244 = vmatprep.subr.bf16.mxu0 %v1711
    %2245 = vmatpush1.bf16.msra.mxu0 %v1710
    %2246 = vmatprep.subr.bf16.mxu0 %v1715
    %2247 = vmatpush1.bf16.msra.mxu0 %v1714
    %2248 = vmatprep.mubr.bf16.mxu0 %v1041
    %2249 = vmatmul.mubr.bf16.gmra.mrb[0].mxu0 %v1040
    %v2250 = vpop.f32.mrb[0].mxu0
    %v2251 = vadd.f32 0.0, %v2250
    %v2252 = vpop.f32.mrb[0].mxu0
    %v2253 = vadd.f32 0.0, %v2252
    %v2254 = vpop.f32.mrb[0].mxu0
    %v2255 = vadd.f32 0.0, %v2254
    %v2256 = vpop.f32.mrb[0].mxu0
    %v2257 = vadd.f32 0.0, %v2256
    %2258 = vmatprep.mubr.bf16.mxu0 %v1047
    %2259 = vmatmul.mubr.bf16.gmra.mrb[0].mxu0 %v1046
    %v2260 = vpop.f32.mrb[0].mxu0
    %v2261 = vadd.f32 0.0, %v2260
    %v2262 = vpop.f32.mrb[0].mxu0
    %v2263 = vadd.f32 0.0, %v2262
    %v2264 = vpop.f32.mrb[0].mxu0
    %v2265 = vadd.f32 0.0, %v2264
    %v2266 = vpop.f32.mrb[0].mxu0
    %v2267 = vadd.f32 0.0, %v2266
    %2268 = vmatprep.mubr.bf16.mxu0 %v1053
    %2269 = vmatmul.mubr.bf16.gmra.mrb[0].mxu0 %v1052
    %v2270 = vpop.f32.mrb[0].mxu0
    %v2271 = vadd.f32 0.0, %v2270
    %v2272 = vpop.f32.mrb[0].mxu0
    %v2273 = vadd.f32 0.0, %v2272
    %v2274 = vpop.f32.mrb[0].mxu0
    %v2275 = vpop.f32.mrb[0].mxu0
    %2276 = vdwg.mxu0
    %2277 = vmatprep.subr.bf16.mxu0 %v1719
    %2278 = vmatpush1.bf16.msra.mxu0 %v1718
    %2279 = vmatprep.subr.bf16.mxu0 %v1723
    %2280 = vmatpush1.bf16.msra.mxu0 %v1722
    %2281 = vmatprep.subr.bf16.mxu0 %v1727
    %2282 = vmatpush1.bf16.msra.mxu0 %v1726
    %2283 = vmatprep.subr.bf16.mxu0 %v1731
    %2284 = vmatpush1.bf16.msra.mxu0 %v1730
    %2285 = vmatprep.subr.bf16.mxu0 %v1735
    %2286 = vmatpush1.bf16.msra.mxu0 %v1734
    %2287 = vmatprep.subr.bf16.mxu0 %v1739
    %2288 = vmatpush1.bf16.msra.mxu0 %v1738
    %2289 = vmatprep.subr.bf16.mxu0 %v1743
    %2290 = vmatpush1.bf16.msra.mxu0 %v1742
    %2291 = vmatprep.subr.bf16.mxu0 %v1747
    %2292 = vmatpush1.bf16.msra.mxu0 %v1746
    %2293 = vmatprep.subr.bf16.mxu0 %v1751
    %2294 = vmatpush1.bf16.msra.mxu0 %v1750
    %2295 = vmatprep.subr.bf16.mxu0 %v1755
    %2296 = vmatpush1.bf16.msra.mxu0 %v1754
    %2297 = vmatprep.subr.bf16.mxu0 %v1759
    %2298 = vmatpush1.bf16.msra.mxu0 %v1758
    %2299 = vmatprep.subr.bf16.mxu0 %v1763
    %2300 = vmatpush1.bf16.msra.mxu0 %v1762
    %2301 = vmatprep.subr.bf16.mxu0 %v1767
    %2302 = vmatpush1.bf16.msra.mxu0 %v1766
    %2303 = vmatprep.subr.bf16.mxu0 %v1771
    %2304 = vmatpush1.bf16.msra.mxu0 %v1770
    %2305 = vmatprep.subr.bf16.mxu0 %v1775
    %2306 = vmatpush1.bf16.msra.mxu0 %v1774
    %2307 = vmatprep.subr.bf16.mxu0 %v1779
    %2308 = vmatpush1.bf16.msra.mxu0 %v1778
    %2309 = vmatprep.mubr.bf16.mxu0 %v1043
    %2310 = vmatmul.mubr.bf16.gmra.mrb[0].mxu0 %v1042
    %v2311 = vpop.f32.mrb[0].mxu0
    %v2312 = vadd.f32 %v2251, %v2311
    %v2313 = vpop.f32.mrb[0].mxu0
    %v2314 = vadd.f32 %v2253, %v2313
    %v2315 = vpop.f32.mrb[0].mxu0
    %v2316 = vadd.f32 %v2255, %v2315
    %v2317 = vpop.f32.mrb[0].mxu0
    %v2318 = vadd.f32 %v2257, %v2317
    %2319 = vmatprep.mubr.bf16.mxu0 %v1049
    %2320 = vmatmul.mubr.bf16.gmra.mrb[0].mxu0 %v1048
    %v2321 = vpop.f32.mrb[0].mxu0
    %v2322 = vadd.f32 %v2261, %v2321
    %v2323 = vpop.f32.mrb[0].mxu0
    %v2324 = vadd.f32 %v2263, %v2323
    %v2325 = vpop.f32.mrb[0].mxu0
    %v2326 = vadd.f32 %v2265, %v2325
    %v2327 = vpop.f32.mrb[0].mxu0
    %v2328 = vadd.f32 %v2267, %v2327
    %2329 = vmatprep.mubr.bf16.mxu0 %v1055
    %2330 = vmatmul.mubr.bf16.gmra.mrb[0].mxu0 %v1054
    %v2331 = vpop.f32.mrb[0].mxu0
    %v2332 = vadd.f32 %v2271, %v2331
    %v2333 = vpop.f32.mrb[0].mxu0
    %v2334 = vadd.f32 %v2273, %v2333
    %v2335 = vpop.f32.mrb[0].mxu0
    %v2336 = vpop.f32.mrb[0].mxu0
    %2337 = vdwg.mxu0
    %2338 = vmatprep.subr.bf16.mxu0 %v1783
    %2339 = vmatpush1.bf16.msra.mxu0 %v1782
    %2340 = vmatprep.subr.bf16.mxu0 %v1787
    %2341 = vmatpush1.bf16.msra.mxu0 %v1786
    %2342 = vmatprep.subr.bf16.mxu0 %v1791
    %2343 = vmatpush1.bf16.msra.mxu0 %v1790
    %2344 = vmatprep.subr.bf16.mxu0 %v1795
    %2345 = vmatpush1.bf16.msra.mxu0 %v1794
    %2346 = vmatprep.subr.bf16.mxu0 %v1799
    %2347 = vmatpush1.bf16.msra.mxu0 %v1798
    %2348 = vmatprep.subr.bf16.mxu0 %v1803
    %2349 = vmatpush1.bf16.msra.mxu0 %v1802
    %2350 = vmatprep.subr.bf16.mxu0 %v1807
    %2351 = vmatpush1.bf16.msra.mxu0 %v1806
    %2352 = vmatprep.subr.bf16.mxu0 %v1811
    %2353 = vmatpush1.bf16.msra.mxu0 %v1810
    %2354 = vmatprep.subr.bf16.mxu0 %v1815
    %2355 = vmatpush1.bf16.msra.mxu0 %v1814
    %2356 = vmatprep.subr.bf16.mxu0 %v1819
    %2357 = vmatpush1.bf16.msra.mxu0 %v1818
    %2358 = vmatprep.subr.bf16.mxu0 %v1823
    %2359 = vmatpush1.bf16.msra.mxu0 %v1822
    %2360 = vmatprep.subr.bf16.mxu0 %v1827
    %2361 = vmatpush1.bf16.msra.mxu0 %v1826
    %2362 = vmatprep.subr.bf16.mxu0 %v1831
    %2363 = vmatpush1.bf16.msra.mxu0 %v1830
    %2364 = vmatprep.subr.bf16.mxu0 %v1835
    %2365 = vmatpush1.bf16.msra.mxu0 %v1834
    %2366 = vmatprep.subr.bf16.mxu0 %v1839
    %2367 = vmatpush1.bf16.msra.mxu0 %v1838
    %2368 = vmatprep.subr.bf16.mxu0 %v1843
    %2369 = vmatpush1.bf16.msra.mxu0 %v1842
    %2370 = vmatprep.mubr.bf16.mxu0 %v1045
    %2371 = vmatmul.mubr.bf16.gmra.mrb[0].mxu0 %v1044
    %v2372 = vpop.f32.mrb[0].mxu0
    %v2373 = vadd.f32 %v2312, %v2372
    %v2374 = vpop.f32.mrb[0].mxu0
    %v2375 = vadd.f32 %v2314, %v2374
    %v2376 = vpop.f32.mrb[0].mxu0
    %v2377 = vadd.f32 %v2316, %v2376
    %v2378 = vpop.f32.mrb[0].mxu0
    %v2379 = vadd.f32 %v2318, %v2378
    %2380 = vmatprep.mubr.bf16.mxu0 %v1051
    %2381 = vmatmul.mubr.bf16.gmra.mrb[0].mxu0 %v1050
    %v2382 = vpop.f32.mrb[0].mxu0
    %v2383 = vadd.f32 %v2322, %v2382
    %v2384 = vpop.f32.mrb[0].mxu0
    %v2385 = vadd.f32 %v2324, %v2384
    %v2386 = vpop.f32.mrb[0].mxu0
    %v2387 = vadd.f32 %v2326, %v2386
    %v2388 = vpop.f32.mrb[0].mxu0
    %v2389 = vadd.f32 %v2328, %v2388
    %2390 = vmatprep.mubr.bf16.mxu0 %v1057
    %2391 = vmatmul.mubr.bf16.gmra.mrb[0].mxu0 %v1056
    %v2392 = vpop.f32.mrb[0].mxu0
    %v2393 = vadd.f32 %v2332, %v2392
    %v2394 = vpop.f32.mrb[0].mxu0
    %v2395 = vadd.f32 %v2334, %v2394
    %v2396 = vpop.f32.mrb[0].mxu0
    %v2397 = vpop.f32.mrb[0].mxu0
    %2398 = vdwg.mxu0
    %v2404 = vrot.slane %v2193, 1
    %v2405 = vrot.slane %v2197, 1
    %v2406 = vsel %vm642, %v2404, %v2405
    %v2407 = vrot.slane %v2203, 1
    %v2408 = vsel %vm642, %v2405, %v2407
    %v2409 = vrot.slane %v2207, 1
    %v2410 = vsel %vm642, %v2407, %v2409
    %v2411 = vrot.slane %v2212, 1
    %v2412 = vsel %vm642, %v2409, %v2411
    %v2417 = vadd.f32 %v2191, %v2406
    %v2418 = vadd.f32 %v2195, %v2408
    %v2419 = vadd.f32 %v2201, %v2410
    %v2420 = vadd.f32 %v2205, %v2412
    %v2426 = vrot.slane %v2373, 2
    %v2427 = vrot.slane %v2377, 2
    %v2428 = vsel %vm656, %v2426, %v2427
    %v2429 = vrot.slane %v2383, 2
    %v2430 = vsel %vm656, %v2427, %v2429
    %v2431 = vrot.slane %v2387, 2
    %v2432 = vsel %vm656, %v2429, %v2431
    %v2433 = vrot.slane %v2393, 2
    %v2434 = vsel %vm656, %v2431, %v2433
    %v2439 = vadd.f32 %v2417, %v2428
    %v2440 = vadd.f32 %v2418, %v2430
    %v2441 = vadd.f32 %v2419, %v2432
    %v2442 = vadd.f32 %v2420, %v2434
    %vm2448 = vcmask 1044480
    %v2449 = vrot.slane %v2375, 3
    %v2450 = vrot.slane %v2379, 3
    %v2451 = vsel %vm2448, %v2449, %v2450
    %v2452 = vrot.slane %v2385, 3
    %v2453 = vsel %vm2448, %v2450, %v2452
    %v2454 = vrot.slane %v2389, 3
    %v2455 = vsel %vm2448, %v2452, %v2454
    %v2456 = vrot.slane %v2395, 3
    %v2457 = vsel %vm2448, %v2454, %v2456
    %v2462 = vadd.f32 %v2439, %v2451
    %v2463 = vadd.f32 %v2440, %v2453
    %v2464 = vadd.f32 %v2441, %v2455
    %v2465 = vadd.f32 %v2442, %v2457
    %v2466 = vld [vmem:[%s3] sm:$0x1]
    %v2468 = vlaneseq
    %v2469 = vshrl.u32 %v2468, 7
    %v2470 = vsub.s32 0, %v2469
    %v2471 = vrot.slane %v2466, %v2470
    %v2473 = vadd.f32 %v2462, %v2471
    %v2474 = vadd.f32 %v2463, %v2471
    %v2475 = vadd.f32 %v2464, %v2471
    %v2476 = vadd.f32 %v2465, %v2471
    %v2477 = vtanh.pop %v2473
    %v2478 = vtanh.pop %v2474
    %v2479 = vtanh.pop %v2475
    %v2480 = vtanh.pop %v2476
    %2482 = vrot.lane.b32.xlu0 %v785, 32
    %v2483 = vpop.permute.xlu0 %2482
    %vm2485 = vcmask 261120
    %v2486 = vsel %vm2485, %v785, %v2483
    %v2489 = vunpack.c.l.s4 1966171168
    %v2490 = vunpack.c.0.s8 %v2489
    %v2491 = vlaneseq
    %v2492 = vshrl.u32 %v2491, 7
    %v2493 = vsub.s32 %v2490, %v2492
    %v2494 = vrot.slane %v2486, %v2493
    %v2495 = vcombine.high %v2494, %v2494
    %v2497 = vunpack.c.l.s4 1966171168
    %v2498 = vunpack.c.0.s8 %v2497
    %v2499 = vlaneseq
    %v2500 = vshrl.u32 %v2499, 7
    %v2501 = vsub.s32 %v2498, %v2500
    %v2502 = vrot.slane %v2494, %v2501
    %v2504 = vunpack.c.l.s4 1966171168
    %v2505 = vunpack.c.0.s8 %v2504
    %v2506 = vlaneseq
    %v2507 = vshrl.u32 %v2506, 7
    %v2508 = vsub.s32 %v2505, %v2507
    %v2509 = vrot.slane %v2495, %v2508
    %v2510 = vlaneseq
    %v2511 = vshrl.u32 %v2510, 7
    %v2512 = vsub.s32 0, %v2511
    %v2513 = vrot.slane %v2502, %v2512
    %v2514 = vlaneseq
    %v2515 = vshrl.u32 %v2514, 7
    %v2516 = vsub.s32 0, %v2515
    %v2517 = vrot.slane %v2509, %v2516
    %2518 = vrot.lane.b32.xlu0 %v2513, 64
    %v2519 = vpop.permute.xlu0 %2518
    %2520 = vrot.lane.b32.xlu0 %v2517, 64
    %v2521 = vpop.permute.xlu0 %2520
    %v2524 = vadd.f32 %v2473, %v2519
    %v2525 = vadd.f32 %v2474, %v2519
    %v2526 = vadd.f32 %v2475, %v2521
    %v2527 = vadd.f32 %v2476, %v2521
    %v2528 = vmax.f32 %v2524, 0.0
    %v2529 = vmax.f32 %v2525, 0.0
    %v2530 = vmax.f32 %v2526, 0.0
    %v2531 = vmax.f32 %v2527, 0.0
    %2536 = vrot.lane.b32.xlu0 %v2528, 64
    %v2537 = vpop.permute.xlu0 %2536
    %2538 = vrot.lane.b32.xlu0 %v2529, 64
    %v2539 = vpop.permute.xlu0 %2538
    %2540 = vrot.lane.b32.xlu0 %v2530, 64
    %v2541 = vpop.permute.xlu0 %2540
    %2542 = vrot.lane.b32.xlu0 %v2531, 64
    %v2543 = vpop.permute.xlu0 %2542
    %v2548 = vmul.f32 %v2477, %v2537
    %v2549 = vmul.f32 %v2478, %v2539
    %v2550 = vmul.f32 %v2479, %v2541
    %v2551 = vmul.f32 %v2480, %v2543
    %v2552 = vadd.s32 %v682, 8
    %v2553 = vsel %vm2485, 13, 12
    %v2554 = vlaneseq
    %v2555 = vshrl.u32 %v2554, 7
    %v2556 = vsub.s32 0, %v2555
    %v2557 = vrot.slane %v2553, %v2556
    %vm2558 = vcmp.le.s32.totalorder %v682, %v2557
    %vm2559 = vcmp.le.s32.totalorder %v2552, %v2557
    %v2560 = vsel %vm2558, 1, 0
    %v2561 = vsel %vm2559, 1, 0
    %vm2562 = vcmp.eq.s32.totalorder %v2560, 1
    %vm2563 = vcmp.eq.s32.totalorder %v2561, 1
    %v2564 = vsel %vm2562, %v2548, -1e+30
    %v2565 = vsel %vm2563, %v2549, -1e+30
    %v2566 = vsel %vm2562, %v2550, -1e+30
    %v2567 = vsel %vm2563, %v2551, -1e+30
    %vm2568 = vcmask 523264
    %v2569 = vsel %vm2568, %v2564, -inf
    %v2570 = vsel %vm2568, %v2565, -inf
    %v2571 = vmax.f32 %v2569, %v2570
    %v2572 = vrot.slane %v2571, 4
    %v2573 = vmax.f32 %v2571, %v2572
    %v2574 = vrot.slane %v2573, 2
    %v2575 = vmax.f32 %v2573, %v2574
    %v2576 = vrot.slane %v2575, 1
    %v2577 = vmax.f32 %v2575, %v2576
    %v2578 = vsel %vm2568, %v2566, -inf
    %v2579 = vsel %vm2568, %v2567, -inf
    %v2580 = vmax.f32 %v2578, %v2579
    %v2581 = vrot.slane %v2580, 4
    %v2582 = vmax.f32 %v2580, %v2581
    %v2583 = vrot.slane %v2582, 2
    %v2584 = vmax.f32 %v2582, %v2583
    %v2585 = vrot.slane %v2584, 1
    %v2586 = vmax.f32 %v2584, %v2585
    %v2587 = vld [vmem:[%s8] sm:$0xff]
    %v2588 = vld [vmem:[%s8 + $0x8] sm:$0xff]
    %v2589 = vld [vmem:[%s8 + $0x10] sm:$0xff]
    %v2590 = vld [vmem:[%s8 + $0x18] sm:$0xff]
    %v2591 = vld [vmem:[%s8 + $0x20] sm:$0xff]
    %v2592 = vld [vmem:[%s8 + $0x28] sm:$0xff]
    %v2593 = vld [vmem:[%s8 + $0x30] sm:$0xff]
    %v2594 = vld [vmem:[%s8 + $0x38] sm:$0xff]
    %v2595 = vld [vmem:[%s9] sm:$0x1]
    %v2597 = vlaneseq
    %v2598 = vshrl.u32 %v2597, 7
    %v2599 = vsub.s32 0, %v2598
    %v2600 = vrot.slane %v2595, %v2599
    %v2604 = vsel %vm714, %v2586, %v2577
    %v2605 = vsel %vm2568, %v2604, 0
    %2607 = vmatprep.subr.mxu0 0.0
    %2608 = vmatpush1.msra.mxu0 %v2587
    %2609 = vmatprep.subr.mxu0 0.0
    %2610 = vmatpush1.msra.mxu0 %v2588
    %2611 = vmatprep.subr.mxu0 0.0
    %2612 = vmatpush1.msra.mxu0 %v2589
    %2613 = vmatprep.subr.mxu0 0.0
    %2614 = vmatpush1.msra.mxu0 %v2590
    %2615 = vmatprep.subr.mxu0 0.0
    %2616 = vmatpush1.msra.mxu0 %v2591
    %2617 = vmatprep.subr.mxu0 0.0
    %2618 = vmatpush1.msra.mxu0 %v2592
    %2619 = vmatprep.subr.mxu0 0.0
    %2620 = vmatpush1.msra.mxu0 %v2593
    %2621 = vmatprep.subr.mxu0 0.0
    %2622 = vmatpush1.msra.mxu0 %v2594
    %2623 = vmatprep.subr.mxu0 0.0
    %2624 = vmatpush1.msra.mxu0 0.0
    %2625 = vmatprep.subr.mxu0 0.0
    %2626 = vmatpush1.msra.mxu0 0.0
    %2627 = vmatprep.subr.mxu0 0.0
    %2628 = vmatpush1.msra.mxu0 0.0
    %2629 = vmatprep.subr.mxu0 0.0
    %2630 = vmatpush1.msra.mxu0 0.0
    %2631 = vmatprep.subr.mxu0 0.0
    %2632 = vmatpush1.msra.mxu0 0.0
    %2633 = vmatprep.subr.mxu0 0.0
    %2634 = vmatpush1.msra.mxu0 0.0
    %2635 = vmatprep.subr.mxu0 0.0
    %2636 = vmatpush1.msra.mxu0 0.0
    %2637 = vmatprep.subr.mxu0 0.0
    %2638 = vmatpush1.msra.mxu0 0.0
    %2639 = vmatprep.subr.mxu0 0.0
    %2640 = vmatpush1.msra.mxu0 0.0
    %2641 = vmatprep.subr.mxu0 0.0
    %2642 = vmatpush1.msra.mxu0 0.0
    %2643 = vmatprep.subr.mxu0 0.0
    %2644 = vmatpush1.msra.mxu0 0.0
    %2645 = vmatprep.subr.mxu0 0.0
    %2646 = vmatpush1.msra.mxu0 0.0
    %2647 = vmatprep.subr.mxu0 0.0
    %2648 = vmatpush1.msra.mxu0 0.0
    %2649 = vmatprep.subr.mxu0 0.0
    %2650 = vmatpush1.msra.mxu0 0.0
    %2651 = vmatprep.subr.mxu0 0.0
    %2652 = vmatpush1.msra.mxu0 0.0
    %2653 = vmatprep.subr.mxu0 0.0
    %2654 = vmatpush1.msra.mxu0 0.0
    %2655 = vmatprep.subr.mxu0 0.0
    %2656 = vmatpush1.msra.mxu0 0.0
    %2657 = vmatprep.subr.mxu0 0.0
    %2658 = vmatpush1.msra.mxu0 0.0
    %2659 = vmatprep.subr.mxu0 0.0
    %2660 = vmatpush1.msra.mxu0 0.0
    %2661 = vmatprep.subr.mxu0 0.0
    %2662 = vmatpush1.msra.mxu0 0.0
    %2663 = vmatprep.subr.mxu0 0.0
    %2664 = vmatpush1.msra.mxu0 0.0
    %2665 = vmatprep.subr.mxu0 0.0
    %2666 = vmatpush1.msra.mxu0 0.0
    %2667 = vmatprep.subr.mxu0 0.0
    %2668 = vmatpush1.msra.mxu0 0.0
    %2669 = vmatprep.subr.mxu0 0.0
    %2670 = vmatpush1.msra.mxu0 0.0
    %2671 = vmatprep.mubr.f32.mxu0 0.0
    %2672 = vmatmul.mubr.f32.gmra.mrb[0].mxu0 %v2605
    %v2673 = vpop.f32.mrb[0].mxu0
    %v2674 = vadd.f32 %v2600, %v2673
    %v2675 = vpop.f32.mrb[0].mxu0
    %2676 = vdwg.mxu0
    %2677 = vst [vmem:[#allocation5] sm:$0x3] %v2674
    // Predicated region
    $region46: #{_gcae_forward_impl.1} parent=1 // pred_check
      _
    $region47: #{_gcae_forward_impl.1} parent=1 // pred_check_branch
      %2679 = sbr.rel (0) target = $region49
    $region48: #{_gcae_forward_impl.1} parent=1 // pred_region
      %s2681 = ssub.s32 32, 32
      %2682 = vsyncadd [#allocation4], %s2681
      %s2684 = sshll.u32 [#allocation5], 4
      %s2685 = int_to_ptr.vmem [resolvable:$true] %s2684
      %2687 = dma.vmem_to_hbm [thread:$0]  %s2685, 32, %s10, [#allocation4]
    $region49: #{_gcae_forward_impl.1} parent=1 // pred_fallthru
      _
    // Predicated region
    $region50: #{_gcae_forward_impl.1} parent=1 // pred_check
      _
    $region51: #{_gcae_forward_impl.1} parent=1 // pred_check_branch
      %2689 = sbr.rel (0) target = $region53
    $region52: #{_gcae_forward_impl.1} parent=1 // pred_region
      %2690 = dma.done [#allocation4], 32
    $region53: #{_gcae_forward_impl.1} parent=1 // pred_fallthru
      _
    %2691 = vsyncpa [#allocation3], 1
    %2692 = vsyncpa [#allocation4], 1

</llo_original>
